<compile_context>
chip_gen: v6e
topology: v6e:2x2x1
jax: 0.10.0
libtpu: 0.0.40
codegen_flags: <defaults>
</compile_context>

<pallas_src>
import functools

import jax
import jax.numpy as jnp
from jax.experimental import pallas as pl
from jax.experimental.pallas import tpu as pltpu


# -----------------------------------------------------------------------------
# Kernels (single invocation, statically unrolled recurrence)
# -----------------------------------------------------------------------------
def _tf_scan(p_ref, h0_ref, w, at, st_ref):
    """Teacher-forced scan over T steps.

    p_ref[t] = data[:, t, :] @ ConMat  (precomputed drive, shape (B, H))
    w        = I - ConMat.T @ ConMat   (H, H)
    at       = A.T                     (H, H)
    Writes states into st_ref (T, B, H) and returns the final state.
    """
    T, B, H = st_ref.shape
    state = jnp.broadcast_to(h0_ref[...], (B, H))           # states[:, 0, :] = h0
    for t in range(T - 1):                                   # static unrolled loop
        st_ref[t] = state
        r = jnp.dot(state, w, preferred_element_type=jnp.float32) + p_ref[t]
        state = r + jnp.tanh(jnp.dot(r, at, preferred_element_type=jnp.float32))
    st_ref[T - 1] = state
    return state


def _lform_kernel_tf_only(p_ref, h0_ref, wpack_ref, st_ref):
    H = st_ref.shape[2]
    wpack = wpack_ref[...]                                   # (2H, H), loaded once
    at, w = wpack[:H], wpack[H:]
    _tf_scan(p_ref, h0_ref, w, at, st_ref)


def _lform_kernel_fused(p_ref, h0_ref, wpack_ref, st_ref, fs_ref):
    """Teacher-forced scan + free-running forecast, fused in one invocation."""
    H = st_ref.shape[2]
    wpack = wpack_ref[...]                                   # (2H, H), loaded once
    at, w = wpack[:H], wpack[H:]
    state = _tf_scan(p_ref, h0_ref, w, at, st_ref)

    F = fs_ref.shape[0]
    for k in range(F - 1):                                   # static unrolled loop
        fs_ref[k] = state
        state = state + jnp.tanh(
            jnp.dot(state, at, preferred_element_type=jnp.float32))
    fs_ref[F - 1] = state                                    # last step: no dead update


# -----------------------------------------------------------------------------
# Wrapper (jitted: precompute, pallas_call plumbing, projections)
# -----------------------------------------------------------------------------
def _lform_forward_impl(data_window, h0, con_mat, a_mat, forecast_horizon):
    """JAX/Pallas equivalent of LForm_Model.forward.

    data_window : (B, T, n_obs)  float32
    h0          : (1, n_hid)     float32
    con_mat     : (n_obs, n_hid) float32
    a_mat       : (n_hid, n_hid) float32
    """
    B, T, n_obs = data_window.shape
    H = a_mat.shape[0]
    f32 = jnp.float32

    data_f32 = data_window.astype(f32)
    c = con_mat.astype(f32)                                   # (n_obs, H)
    at = a_mat.astype(f32).T                                  # (H, H)  one-time
    w = jnp.eye(H, dtype=f32) - c.T @ c                       # I - C^T C  (H, H)
    wpack = jnp.concatenate([at, w], axis=0)                  # (2H, H) packed weights

    # Teacher-forcing drive for every step as ONE batched matmul, time-major.
    p_tm = jnp.einsum('btn,nh->tbh', data_f32, c)             # (T, B, H)

    full = lambda shape: pl.BlockSpec(shape, lambda i: (0,) * len(shape))
    in_specs = [full((T, B, H)),       # P (teacher-forcing drive)
                full((1, H)),          # h0
                full((2 * H, H))]      # packed [A.T ; I - C^T C]

    if forecast_horizon:
        F = int(forecast_horizon)
        kernel = _lform_kernel_fused
        out_shape = (jax.ShapeDtypeStruct((T, B, H), f32),
                     jax.ShapeDtypeStruct((F, B, H), f32))
        out_specs = (full((T, B, H)), full((F, B, H)))
    else:
        # NOTE: forecast_horizon=0 is treated the same as None (no forecast),
        # matching the truthiness test in the PyTorch module.
        kernel = _lform_kernel_tf_only
        out_shape = jax.ShapeDtypeStruct((T, B, H), f32)
        out_specs = full((T, B, H))

    outs = pl.pallas_call(
        kernel,
        out_shape=out_shape,
        grid=(1,),                     # single invocation; recurrence unrolled inside
        in_specs=in_specs,
        out_specs=out_specs,
        compiler_params=pltpu.CompilerParams(
            dimension_semantics=("arbitrary",)),
    )(p_tm, h0.astype(f32), wpack)

    if forecast_horizon:
        st_tm, fs_tm = outs
    else:
        st_tm, fs_tm = outs, None

    states = jnp.transpose(st_tm, (1, 0, 2))                  # (B, T, H)

    # expectations / delta_terms reconstructed as batched XLA ops (same math
    # as per-step in-kernel projections, fused under jit).
    expectations = jnp.einsum('bth,oh->bto', states, c)       # (B, T, n_obs)
    mask = (jnp.arange(T) < T - 1)[None, :, None]
    delta_terms = jnp.where(mask, data_f32 - expectations, 0.0)

    forecasts = None
    future_states = None
    if forecast_horizon:
        future_states = jnp.transpose(fs_tm, (1, 0, 2))        # (B, F, H)
        forecasts = jnp.einsum('bfh,oh->bfo', future_states, c)  # (B, F, n_obs)

    return expectations, states, delta_terms, forecasts, future_states


lform_forward = jax.jit(_lform_forward_impl, static_argnames=("forecast_horizon",))


# -----------------------------------------------------------------------------
# Pure-JAX reference (original, un-folded formulation; correctness check only)
# -----------------------------------------------------------------------------
def lform_ref(data_window, h0, c, a, forecast_horizon=None):
    B, T, n_obs = data_window.shape
    H = a.shape[0]
    s = jnp.broadcast_to(h0, (B, H))
    exps, sts, dls = [], [], []
    for t in range(T - 1):
        sts.append(s)
        y_hat = s @ c.T
        delta = data_window[:, t, :] - y_hat
        exps.append(y_hat)
        dls.append(delta)
        r = s + delta @ c
        s = r + jnp.tanh(r @ a.T)
    sts.append(s)
    exps.append(s @ c.T)
    dls.append(jnp.zeros((B, n_obs), jnp.float32))
    expectations = jnp.stack(exps, axis=1)
    states = jnp.stack(sts, axis=1)
    delta_terms = jnp.stack(dls, axis=1)

    forecasts = None
    future_states = None
    if forecast_horizon:
        fs = [states[:, T - 1, :]]
        fcs = []
        for _ in range(1, forecast_horizon):
            fcs.append(fs[-1] @ c.T)
            r = fs[-1]
            fs.append(r + jnp.tanh(r @ a.T))
        fcs.append(fs[-1] @ c.T)
        forecasts = jnp.stack(fcs, axis=1)
        future_states = jnp.stack(fs, axis=1)
    return expectations, states, delta_terms, forecasts, future_states


# -----------------------------------------------------------------------------
# Main
# -----------------------------------------------------------------------------
if __name__ == "__main__":
    n_obs, n_hid, batch, seq, horizon = 4, 32, 2, 8, 4
    init_lo, init_hi = -0.75, 0.75

    key = jax.random.PRNGKey(0)
    k_a, k_h0, k_x = jax.random.split(key, 3)

    # Deterministic parameter init (module __init__ shapes):
    a_mat = jax.random.uniform(k_a, (n_hid, n_hid), jnp.float32, init_lo, init_hi)
    h0 = jax.random.uniform(k_h0, (1, n_hid), jnp.float32, init_lo, init_hi)  # s0_nature='random_'
    # TODO(synk): ConMat assumed to be the fixed HCNN connector [I | 0]; exact lstm_cell init unknown.
    con_mat = jnp.concatenate(
        [jnp.eye(n_obs, dtype=jnp.float32),
         jnp.zeros((n_obs, n_hid - n_obs), jnp.float32)], axis=1)

    data_window = jax.random.normal(k_x, (batch, seq, n_obs), jnp.float32)

    names = ["expectations", "states", "delta_terms", "forecasts", "future_states"]

    # --- with forecast horizon (fused kernel) ---
    out = lform_forward(data_window, h0, con_mat, a_mat, forecast_horizon=horizon)
    out = jax.block_until_ready(out)
    ref = lform_ref(data_window, h0, con_mat, a_mat, forecast_horizon=horizon)
    for name, got, want in zip(names, out, ref):
        assert got.shape == want.shape, (name, got.shape, want.shape)
        err = float(jnp.max(jnp.abs(got - want)))
        assert err < 1e-4, (name, err)

    # --- teacher-forcing only (no forecast) ---
    out2 = lform_forward(data_window, h0, con_mat, a_mat, forecast_horizon=None)
    out2 = jax.block_until_ready(out2)
    ref2 = lform_ref(data_window, h0, con_mat, a_mat, forecast_horizon=None)
    for name, got, want in zip(names, out2, ref2):
        if want is None:
            assert got is None, name
            continue
        assert got.shape == want.shape, (name, got.shape, want.shape)
        err = float(jnp.max(jnp.abs(got - want)))
        assert err < 1e-4, (name, err)

    print("KERNEL_OK")
</pallas_src>

<mosaic_0001>
module attributes {stable_mosaic.version = 11 : i64} {
  func.func @_lform_kernel_fused(%arg0: i32, %arg1: memref<8x2x32xf32, #tpu.memory_space<vmem>>, %arg2: memref<1x32xf32, #tpu.memory_space<vmem>>, %arg3: memref<64x32xf32, #tpu.memory_space<vmem>>, %arg4: memref<8x2x32xf32, #tpu.memory_space<vmem>>, %arg5: memref<4x2x32xf32, #tpu.memory_space<vmem>>) attributes {dimension_semantics = [#tpu.dimension_semantics<arbitrary>], iteration_bounds = array<i64: 1>, scalar_prefetch = 0 : i64, scratch_operands = 0 : i64, tpu.core_type = #tpu.core_type<tc>, window_params = [{pipeline_mode = #tpu.pipeline_mode<synchronous>, transform_indices = @transform_0, window_bounds = array<i64: 8, 2, 32>}, {pipeline_mode = #tpu.pipeline_mode<synchronous>, transform_indices = @transform_1, window_bounds = array<i64: 1, 32>}, {pipeline_mode = #tpu.pipeline_mode<synchronous>, transform_indices = @transform_2, window_bounds = array<i64: 64, 32>}, {pipeline_mode = #tpu.pipeline_mode<synchronous>, transform_indices = @transform_3, window_bounds = array<i64: 8, 2, 32>}, {pipeline_mode = #tpu.pipeline_mode<synchronous>, transform_indices = @transform_4, window_bounds = array<i64: 4, 2, 32>}]} {
    %c0 = arith.constant 0 : index
    %c0_0 = arith.constant 0 : index
    %0 = vector.load %arg3[%c0, %c0_0] : memref<64x32xf32, #tpu.memory_space<vmem>>, vector<64x32xf32>
    %1 = vector.extract_strided_slice %0 {offsets = [0, 0], sizes = [32, 32], strides = [1, 1]} : vector<64x32xf32> to vector<32x32xf32>
    %2 = vector.extract_strided_slice %0 {offsets = [32, 0], sizes = [32, 32], strides = [1, 1]} : vector<64x32xf32> to vector<32x32xf32>
    %c0_1 = arith.constant 0 : index
    %c0_2 = arith.constant 0 : index
    %3 = vector.load %arg2[%c0_1, %c0_2] : memref<1x32xf32, #tpu.memory_space<vmem>>, vector<1x32xf32>
    %4 = vector.shape_cast %3 : vector<1x32xf32> to vector<1x32xf32>
    %5 = vector.broadcast %4 : vector<1x32xf32> to vector<2x32xf32>
    %c0_3 = arith.constant 0 : index
    %c0_4 = arith.constant 0 : index
    %c0_5 = arith.constant 0 : index
    %6 = vector.load %arg4[%c0_3, %c0_4, %c0_5] : memref<8x2x32xf32, #tpu.memory_space<vmem>>, vector<1x2x32xf32>
    %7 = vector.shape_cast %6 : vector<1x2x32xf32> to vector<2x32xf32>
    %8 = vector.shape_cast %5 : vector<2x32xf32> to vector<1x2x32xf32>
    tpu.vector_store %arg4[%c0_3, %c0_4, %c0_5], %8 {strides = array<i32>} : memref<8x2x32xf32, #tpu.memory_space<vmem>>, vector<1x2x32xf32>,
    %cst = arith.constant dense<0.000000e+00> : vector<2x32xf32>
    %9 = tpu.matmul %5, %2, %cst {dimension_numbers = #tpu.dot_dimension_numbers<[1], [0], [0], [1], [0, 0, 1, 1], [], []>} : vector<2x32xf32>, vector<32x32xf32>, vector<2x32xf32> -> vector<2x32xf32>
    %c0_6 = arith.constant 0 : index
    %c0_7 = arith.constant 0 : index
    %c0_8 = arith.constant 0 : index
    %10 = vector.load %arg1[%c0_6, %c0_7, %c0_8] : memref<8x2x32xf32, #tpu.memory_space<vmem>>, vector<1x2x32xf32>
    %11 = vector.shape_cast %10 : vector<1x2x32xf32> to vector<2x32xf32>
    %12 = arith.addf %9, %11 : vector<2x32xf32>
    %cst_9 = arith.constant dense<0.000000e+00> : vector<2x32xf32>
    %13 = tpu.matmul %12, %1, %cst_9 {dimension_numbers = #tpu.dot_dimension_numbers<[1], [0], [0], [1], [0, 0, 1, 1], [], []>} : vector<2x32xf32>, vector<32x32xf32>, vector<2x32xf32> -> vector<2x32xf32>
    %14 = math.tanh %13 : vector<2x32xf32>
    %15 = arith.addf %12, %14 : vector<2x32xf32>
    %c1 = arith.constant 1 : index
    %c0_10 = arith.constant 0 : index
    %c0_11 = arith.constant 0 : index
    %16 = vector.load %arg4[%c1, %c0_10, %c0_11] : memref<8x2x32xf32, #tpu.memory_space<vmem>>, vector<1x2x32xf32>
    %17 = vector.shape_cast %16 : vector<1x2x32xf32> to vector<2x32xf32>
    %18 = vector.shape_cast %15 : vector<2x32xf32> to vector<1x2x32xf32>
    tpu.vector_store %arg4[%c1, %c0_10, %c0_11], %18 {strides = array<i32>} : memref<8x2x32xf32, #tpu.memory_space<vmem>>, vector<1x2x32xf32>,
    %cst_12 = arith.constant dense<0.000000e+00> : vector<2x32xf32>
    %19 = tpu.matmul %15, %2, %cst_12 {dimension_numbers = #tpu.dot_dimension_numbers<[1], [0], [0], [1], [0, 0, 1, 1], [], []>} : vector<2x32xf32>, vector<32x32xf32>, vector<2x32xf32> -> vector<2x32xf32>
    %c1_13 = arith.constant 1 : index
    %c0_14 = arith.constant 0 : index
    %c0_15 = arith.constant 0 : index
    %20 = vector.load %arg1[%c1_13, %c0_14, %c0_15] : memref<8x2x32xf32, #tpu.memory_space<vmem>>, vector<1x2x32xf32>
    %21 = vector.shape_cast %20 : vector<1x2x32xf32> to vector<2x32xf32>
    %22 = arith.addf %19, %21 : vector<2x32xf32>
    %cst_16 = arith.constant dense<0.000000e+00> : vector<2x32xf32>
    %23 = tpu.matmul %22, %1, %cst_16 {dimension_numbers = #tpu.dot_dimension_numbers<[1], [0], [0], [1], [0, 0, 1, 1], [], []>} : vector<2x32xf32>, vector<32x32xf32>, vector<2x32xf32> -> vector<2x32xf32>
    %24 = math.tanh %23 : vector<2x32xf32>
    %25 = arith.addf %22, %24 : vector<2x32xf32>
    %c2 = arith.constant 2 : index
    %c0_17 = arith.constant 0 : index
    %c0_18 = arith.constant 0 : index
    %26 = vector.load %arg4[%c2, %c0_17, %c0_18] : memref<8x2x32xf32, #tpu.memory_space<vmem>>, vector<1x2x32xf32>
    %27 = vector.shape_cast %26 : vector<1x2x32xf32> to vector<2x32xf32>
    %28 = vector.shape_cast %25 : vector<2x32xf32> to vector<1x2x32xf32>
    tpu.vector_store %arg4[%c2, %c0_17, %c0_18], %28 {strides = array<i32>} : memref<8x2x32xf32, #tpu.memory_space<vmem>>, vector<1x2x32xf32>,
    %cst_19 = arith.constant dense<0.000000e+00> : vector<2x32xf32>
    %29 = tpu.matmul %25, %2, %cst_19 {dimension_numbers = #tpu.dot_dimension_numbers<[1], [0], [0], [1], [0, 0, 1, 1], [], []>} : vector<2x32xf32>, vector<32x32xf32>, vector<2x32xf32> -> vector<2x32xf32>
    %c2_20 = arith.constant 2 : index
    %c0_21 = arith.constant 0 : index
    %c0_22 = arith.constant 0 : index
    %30 = vector.load %arg1[%c2_20, %c0_21, %c0_22] : memref<8x2x32xf32, #tpu.memory_space<vmem>>, vector<1x2x32xf32>
    %31 = vector.shape_cast %30 : vector<1x2x32xf32> to vector<2x32xf32>
    %32 = arith.addf %29, %31 : vector<2x32xf32>
    %cst_23 = arith.constant dense<0.000000e+00> : vector<2x32xf32>
    %33 = tpu.matmul %32, %1, %cst_23 {dimension_numbers = #tpu.dot_dimension_numbers<[1], [0], [0], [1], [0, 0, 1, 1], [], []>} : vector<2x32xf32>, vector<32x32xf32>, vector<2x32xf32> -> vector<2x32xf32>
    %34 = math.tanh %33 : vector<2x32xf32>
    %35 = arith.addf %32, %34 : vector<2x32xf32>
    %c3 = arith.constant 3 : index
    %c0_24 = arith.constant 0 : index
    %c0_25 = arith.constant 0 : index
    %36 = vector.load %arg4[%c3, %c0_24, %c0_25] : memref<8x2x32xf32, #tpu.memory_space<vmem>>, vector<1x2x32xf32>
    %37 = vector.shape_cast %36 : vector<1x2x32xf32> to vector<2x32xf32>
    %38 = vector.shape_cast %35 : vector<2x32xf32> to vector<1x2x32xf32>
    tpu.vector_store %arg4[%c3, %c0_24, %c0_25], %38 {strides = array<i32>} : memref<8x2x32xf32, #tpu.memory_space<vmem>>, vector<1x2x32xf32>,
    %cst_26 = arith.constant dense<0.000000e+00> : vector<2x32xf32>
    %39 = tpu.matmul %35, %2, %cst_26 {dimension_numbers = #tpu.dot_dimension_numbers<[1], [0], [0], [1], [0, 0, 1, 1], [], []>} : vector<2x32xf32>, vector<32x32xf32>, vector<2x32xf32> -> vector<2x32xf32>
    %c3_27 = arith.constant 3 : index
    %c0_28 = arith.constant 0 : index
    %c0_29 = arith.constant 0 : index
    %40 = vector.load %arg1[%c3_27, %c0_28, %c0_29] : memref<8x2x32xf32, #tpu.memory_space<vmem>>, vector<1x2x32xf32>
    %41 = vector.shape_cast %40 : vector<1x2x32xf32> to vector<2x32xf32>
    %42 = arith.addf %39, %41 : vector<2x32xf32>
    %cst_30 = arith.constant dense<0.000000e+00> : vector<2x32xf32>
    %43 = tpu.matmul %42, %1, %cst_30 {dimension_numbers = #tpu.dot_dimension_numbers<[1], [0], [0], [1], [0, 0, 1, 1], [], []>} : vector<2x32xf32>, vector<32x32xf32>, vector<2x32xf32> -> vector<2x32xf32>
    %44 = math.tanh %43 : vector<2x32xf32>
    %45 = arith.addf %42, %44 : vector<2x32xf32>
    %c4 = arith.constant 4 : index
    %c0_31 = arith.constant 0 : index
    %c0_32 = arith.constant 0 : index
    %46 = vector.load %arg4[%c4, %c0_31, %c0_32] : memref<8x2x32xf32, #tpu.memory_space<vmem>>, vector<1x2x32xf32>
    %47 = vector.shape_cast %46 : vector<1x2x32xf32> to vector<2x32xf32>
    %48 = vector.shape_cast %45 : vector<2x32xf32> to vector<1x2x32xf32>
    tpu.vector_store %arg4[%c4, %c0_31, %c0_32], %48 {strides = array<i32>} : memref<8x2x32xf32, #tpu.memory_space<vmem>>, vector<1x2x32xf32>,
    %cst_33 = arith.constant dense<0.000000e+00> : vector<2x32xf32>
    %49 = tpu.matmul %45, %2, %cst_33 {dimension_numbers = #tpu.dot_dimension_numbers<[1], [0], [0], [1], [0, 0, 1, 1], [], []>} : vector<2x32xf32>, vector<32x32xf32>, vector<2x32xf32> -> vector<2x32xf32>
    %c4_34 = arith.constant 4 : index
    %c0_35 = arith.constant 0 : index
    %c0_36 = arith.constant 0 : index
    %50 = vector.load %arg1[%c4_34, %c0_35, %c0_36] : memref<8x2x32xf32, #tpu.memory_space<vmem>>, vector<1x2x32xf32>
    %51 = vector.shape_cast %50 : vector<1x2x32xf32> to vector<2x32xf32>
    %52 = arith.addf %49, %51 : vector<2x32xf32>
    %cst_37 = arith.constant dense<0.000000e+00> : vector<2x32xf32>
    %53 = tpu.matmul %52, %1, %cst_37 {dimension_numbers = #tpu.dot_dimension_numbers<[1], [0], [0], [1], [0, 0, 1, 1], [], []>} : vector<2x32xf32>, vector<32x32xf32>, vector<2x32xf32> -> vector<2x32xf32>
    %54 = math.tanh %53 : vector<2x32xf32>
    %55 = arith.addf %52, %54 : vector<2x32xf32>
    %c5 = arith.constant 5 : index
    %c0_38 = arith.constant 0 : index
    %c0_39 = arith.constant 0 : index
    %56 = vector.load %arg4[%c5, %c0_38, %c0_39] : memref<8x2x32xf32, #tpu.memory_space<vmem>>, vector<1x2x32xf32>
    %57 = vector.shape_cast %56 : vector<1x2x32xf32> to vector<2x32xf32>
    %58 = vector.shape_cast %55 : vector<2x32xf32> to vector<1x2x32xf32>
    tpu.vector_store %arg4[%c5, %c0_38, %c0_39], %58 {strides = array<i32>} : memref<8x2x32xf32, #tpu.memory_space<vmem>>, vector<1x2x32xf32>,
    %cst_40 = arith.constant dense<0.000000e+00> : vector<2x32xf32>
    %59 = tpu.matmul %55, %2, %cst_40 {dimension_numbers = #tpu.dot_dimension_numbers<[1], [0], [0], [1], [0, 0, 1, 1], [], []>} : vector<2x32xf32>, vector<32x32xf32>, vector<2x32xf32> -> vector<2x32xf32>
    %c5_41 = arith.constant 5 : index
    %c0_42 = arith.constant 0 : index
    %c0_43 = arith.constant 0 : index
    %60 = vector.load %arg1[%c5_41, %c0_42, %c0_43] : memref<8x2x32xf32, #tpu.memory_space<vmem>>, vector<1x2x32xf32>
    %61 = vector.shape_cast %60 : vector<1x2x32xf32> to vector<2x32xf32>
    %62 = arith.addf %59, %61 : vector<2x32xf32>
    %cst_44 = arith.constant dense<0.000000e+00> : vector<2x32xf32>
    %63 = tpu.matmul %62, %1, %cst_44 {dimension_numbers = #tpu.dot_dimension_numbers<[1], [0], [0], [1], [0, 0, 1, 1], [], []>} : vector<2x32xf32>, vector<32x32xf32>, vector<2x32xf32> -> vector<2x32xf32>
    %64 = math.tanh %63 : vector<2x32xf32>
    %65 = arith.addf %62, %64 : vector<2x32xf32>
    %c6 = arith.constant 6 : index
    %c0_45 = arith.constant 0 : index
    %c0_46 = arith.constant 0 : index
    %66 = vector.load %arg4[%c6, %c0_45, %c0_46] : memref<8x2x32xf32, #tpu.memory_space<vmem>>, vector<1x2x32xf32>
    %67 = vector.shape_cast %66 : vector<1x2x32xf32> to vector<2x32xf32>
    %68 = vector.shape_cast %65 : vector<2x32xf32> to vector<1x2x32xf32>
    tpu.vector_store %arg4[%c6, %c0_45, %c0_46], %68 {strides = array<i32>} : memref<8x2x32xf32, #tpu.memory_space<vmem>>, vector<1x2x32xf32>,
    %cst_47 = arith.constant dense<0.000000e+00> : vector<2x32xf32>
    %69 = tpu.matmul %65, %2, %cst_47 {dimension_numbers = #tpu.dot_dimension_numbers<[1], [0], [0], [1], [0, 0, 1, 1], [], []>} : vector<2x32xf32>, vector<32x32xf32>, vector<2x32xf32> -> vector<2x32xf32>
    %c6_48 = arith.constant 6 : index
    %c0_49 = arith.constant 0 : index
    %c0_50 = arith.constant 0 : index
    %70 = vector.load %arg1[%c6_48, %c0_49, %c0_50] : memref<8x2x32xf32, #tpu.memory_space<vmem>>, vector<1x2x32xf32>
    %71 = vector.shape_cast %70 : vector<1x2x32xf32> to vector<2x32xf32>
    %72 = arith.addf %69, %71 : vector<2x32xf32>
    %cst_51 = arith.constant dense<0.000000e+00> : vector<2x32xf32>
    %73 = tpu.matmul %72, %1, %cst_51 {dimension_numbers = #tpu.dot_dimension_numbers<[1], [0], [0], [1], [0, 0, 1, 1], [], []>} : vector<2x32xf32>, vector<32x32xf32>, vector<2x32xf32> -> vector<2x32xf32>
    %74 = math.tanh %73 : vector<2x32xf32>
    %75 = arith.addf %72, %74 : vector<2x32xf32>
    %c7 = arith.constant 7 : index
    %c0_52 = arith.constant 0 : index
    %c0_53 = arith.constant 0 : index
    %76 = vector.load %arg4[%c7, %c0_52, %c0_53] : memref<8x2x32xf32, #tpu.memory_space<vmem>>, vector<1x2x32xf32>
    %77 = vector.shape_cast %76 : vector<1x2x32xf32> to vector<2x32xf32>
    %78 = vector.shape_cast %75 : vector<2x32xf32> to vector<1x2x32xf32>
    tpu.vector_store %arg4[%c7, %c0_52, %c0_53], %78 {strides = array<i32>} : memref<8x2x32xf32, #tpu.memory_space<vmem>>, vector<1x2x32xf32>,
    %c0_54 = arith.constant 0 : index
    %c0_55 = arith.constant 0 : index
    %c0_56 = arith.constant 0 : index
    %79 = vector.load %arg5[%c0_54, %c0_55, %c0_56] : memref<4x2x32xf32, #tpu.memory_space<vmem>>, vector<1x2x32xf32>
    %80 = vector.shape_cast %79 : vector<1x2x32xf32> to vector<2x32xf32>
    %81 = vector.shape_cast %75 : vector<2x32xf32> to vector<1x2x32xf32>
    tpu.vector_store %arg5[%c0_54, %c0_55, %c0_56], %81 {strides = array<i32>} : memref<4x2x32xf32, #tpu.memory_space<vmem>>, vector<1x2x32xf32>,
    %cst_57 = arith.constant dense<0.000000e+00> : vector<2x32xf32>
    %82 = tpu.matmul %75, %1, %cst_57 {dimension_numbers = #tpu.dot_dimension_numbers<[1], [0], [0], [1], [0, 0, 1, 1], [], []>} : vector<2x32xf32>, vector<32x32xf32>, vector<2x32xf32> -> vector<2x32xf32>
    %83 = math.tanh %82 : vector<2x32xf32>
    %84 = arith.addf %75, %83 : vector<2x32xf32>
    %c1_58 = arith.constant 1 : index
    %c0_59 = arith.constant 0 : index
    %c0_60 = arith.constant 0 : index
    %85 = vector.load %arg5[%c1_58, %c0_59, %c0_60] : memref<4x2x32xf32, #tpu.memory_space<vmem>>, vector<1x2x32xf32>
    %86 = vector.shape_cast %85 : vector<1x2x32xf32> to vector<2x32xf32>
    %87 = vector.shape_cast %84 : vector<2x32xf32> to vector<1x2x32xf32>
    tpu.vector_store %arg5[%c1_58, %c0_59, %c0_60], %87 {strides = array<i32>} : memref<4x2x32xf32, #tpu.memory_space<vmem>>, vector<1x2x32xf32>,
    %cst_61 = arith.constant dense<0.000000e+00> : vector<2x32xf32>
    %88 = tpu.matmul %84, %1, %cst_61 {dimension_numbers = #tpu.dot_dimension_numbers<[1], [0], [0], [1], [0, 0, 1, 1], [], []>} : vector<2x32xf32>, vector<32x32xf32>, vector<2x32xf32> -> vector<2x32xf32>
    %89 = math.tanh %88 : vector<2x32xf32>
    %90 = arith.addf %84, %89 : vector<2x32xf32>
    %c2_62 = arith.constant 2 : index
    %c0_63 = arith.constant 0 : index
    %c0_64 = arith.constant 0 : index
    %91 = vector.load %arg5[%c2_62, %c0_63, %c0_64] : memref<4x2x32xf32, #tpu.memory_space<vmem>>, vector<1x2x32xf32>
    %92 = vector.shape_cast %91 : vector<1x2x32xf32> to vector<2x32xf32>
    %93 = vector.shape_cast %90 : vector<2x32xf32> to vector<1x2x32xf32>
    tpu.vector_store %arg5[%c2_62, %c0_63, %c0_64], %93 {strides = array<i32>} : memref<4x2x32xf32, #tpu.memory_space<vmem>>, vector<1x2x32xf32>,
    %cst_65 = arith.constant dense<0.000000e+00> : vector<2x32xf32>
    %94 = tpu.matmul %90, %1, %cst_65 {dimension_numbers = #tpu.dot_dimension_numbers<[1], [0], [0], [1], [0, 0, 1, 1], [], []>} : vector<2x32xf32>, vector<32x32xf32>, vector<2x32xf32> -> vector<2x32xf32>
    %95 = math.tanh %94 : vector<2x32xf32>
    %96 = arith.addf %90, %95 : vector<2x32xf32>
    %c3_66 = arith.constant 3 : index
    %c0_67 = arith.constant 0 : index
    %c0_68 = arith.constant 0 : index
    %97 = vector.load %arg5[%c3_66, %c0_67, %c0_68] : memref<4x2x32xf32, #tpu.memory_space<vmem>>, vector<1x2x32xf32>
    %98 = vector.shape_cast %97 : vector<1x2x32xf32> to vector<2x32xf32>
    %99 = vector.shape_cast %96 : vector<2x32xf32> to vector<1x2x32xf32>
    tpu.vector_store %arg5[%c3_66, %c0_67, %c0_68], %99 {strides = array<i32>} : memref<4x2x32xf32, #tpu.memory_space<vmem>>, vector<1x2x32xf32>,
    return
  }
  func.func @transform_0(%arg0: i32) -> (i32, i32, i32) {
    %c0_i32 = arith.constant 0 : i32
    %c0_i32_0 = arith.constant 0 : i32
    %c0_i32_1 = arith.constant 0 : i32
    %c0_i32_2 = arith.constant 0 : i32
    return %c0_i32, %c0_i32_0, %c0_i32_1 : i32, i32, i32
  }
  func.func @transform_1(%arg0: i32) -> (i32, i32) {
    %c0_i32 = arith.constant 0 : i32
    %c0_i32_0 = arith.constant 0 : i32
    %c0_i32_1 = arith.constant 0 : i32
    return %c0_i32, %c0_i32_0 : i32, i32
  }
  func.func @transform_2(%arg0: i32) -> (i32, i32) {
    %c0_i32 = arith.constant 0 : i32
    %c0_i32_0 = arith.constant 0 : i32
    %c0_i32_1 = arith.constant 0 : i32
    return %c0_i32, %c0_i32_0 : i32, i32
  }
  func.func @transform_3(%arg0: i32) -> (i32, i32, i32) {
    %c0_i32 = arith.constant 0 : i32
    %c0_i32_0 = arith.constant 0 : i32
    %c0_i32_1 = arith.constant 0 : i32
    %c0_i32_2 = arith.constant 0 : i32
    return %c0_i32, %c0_i32_0, %c0_i32_1 : i32, i32, i32
  }
  func.func @transform_4(%arg0: i32) -> (i32, i32, i32) {
    %c0_i32 = arith.constant 0 : i32
    %c0_i32_0 = arith.constant 0 : i32
    %c0_i32_1 = arith.constant 0 : i32
    %c0_i32_2 = arith.constant 0 : i32
    return %c0_i32, %c0_i32_0, %c0_i32_1 : i32, i32, i32
  }
}

</mosaic_0001>

<llo_original>
// kernel: _lform_forward_impl.1
$region0: #{_lform_forward_impl.1}
  #allocation0 [shape = 'u32[]', space=smem, size = 0x4, offset = 0x4, fixed_abs, tag = 'smem constant byte address 0x4 - core index']
  #allocation1 [shape = 'u32[144,128]{1,0:T(1,128)}', space=vmem, size = 0x12000, scoped, tag = 'internal scratch']
  %s0 = inlined_call_operand.vmem [shape: f32[8,2,32], index: 0, kind: input, shape index: {}]
  %s1 = inlined_call_operand.vmem [shape: f32[1,32], index: 1, kind: input, shape index: {}]
  %s2 = inlined_call_operand.vmem [shape: f32[64,32], index: 2, kind: input, shape index: {}]
  %s3 = inlined_call_operand.vmem [shape: f32[8,2,32], index: 3, kind: output, shape index: {0}]
  %s4 = inlined_call_operand.vmem [shape: f32[4,2,32], index: 4, kind: output, shape index: {1}]
  %5 = xla_tuple %s3, %s4
  %s6 = sld [smem:[#allocation0]]
  $region30: #{_lform_forward_impl.1} parent=0
    _
  %s8 = ssub.s32 1, %s6
  %s9 = scalar_select 0, %s8, %s6
  // Predicated region
  $region2: #{_lform_forward_impl.1} parent=0 // pred_check
    _
  $region3: #{_lform_forward_impl.1} parent=0 // pred_check_branch
    %11 = sbr.rel (0) target = $region5
  $region4: #{_lform_forward_impl.1} parent=0 // pred_region
    _
  $region5: #{_lform_forward_impl.1} parent=0 // pred_fallthru
    _
  // Predicated region
  $region6: #{_lform_forward_impl.1} parent=0 // pred_check
    _
  $region7: #{_lform_forward_impl.1} parent=0 // pred_check_branch
    %13 = sbr.rel (0) target = $region9
  $region8: #{_lform_forward_impl.1} parent=0 // pred_region
    _
  $region9: #{_lform_forward_impl.1} parent=0 // pred_fallthru
    _
  // Predicated region
  $region10: #{_lform_forward_impl.1} parent=0 // pred_check
    _
  $region11: #{_lform_forward_impl.1} parent=0 // pred_check_branch
    %15 = sbr.rel (0) target = $region13
  $region12: #{_lform_forward_impl.1} parent=0 // pred_region
    _
  $region13: #{_lform_forward_impl.1} parent=0 // pred_fallthru
    _
  %v16 = vld [vmem:[%s2] sm:$0xff]
  %v17 = vld [vmem:[%s2 + $0x8] sm:$0xff]
  %v18 = vld [vmem:[%s2 + $0x10] sm:$0xff]
  %v19 = vld [vmem:[%s2 + $0x18] sm:$0xff]
  %v20 = vld [vmem:[%s2 + $0x20] sm:$0xff]
  %v21 = vld [vmem:[%s2 + $0x28] sm:$0xff]
  %v22 = vld [vmem:[%s2 + $0x30] sm:$0xff]
  %v23 = vld [vmem:[%s2 + $0x38] sm:$0xff]
  %v24 = vld [vmem:[%s1] sm:$0x1]
  %v26 = vlaneseq
  %v27 = vshrl.u32 %v26, 7
  %v28 = vsub.s32 0, %v27
  %v29 = vrot.slane %v24, %v28
  %vm31 = vcmask 254976
  %32 = vst.msk [vmem:[%s3] sm:$0x3] %vm31, %v29
  %v33 = vld [vmem:[%s0] sm:$0x3]
  %vm34 = vcmask 261120
  %v35 = vsel %vm34, %v29, 0
  %37 = vmatprep.subr.mxu0 0.0
  %38 = vmatpush1.msra.mxu0 0.0
  %39 = vmatprep.subr.mxu0 0.0
  %40 = vmatpush1.msra.mxu0 0.0
  %41 = vmatprep.subr.mxu0 0.0
  %42 = vmatpush1.msra.mxu0 0.0
  %43 = vmatprep.subr.mxu0 0.0
  %44 = vmatpush1.msra.mxu0 0.0
  %45 = vmatprep.subr.mxu0 0.0
  %46 = vmatpush1.msra.mxu0 0.0
  %47 = vmatprep.subr.mxu0 0.0
  %48 = vmatpush1.msra.mxu0 0.0
  %49 = vmatprep.subr.mxu0 0.0
  %50 = vmatpush1.msra.mxu0 0.0
  %51 = vmatprep.subr.mxu0 0.0
  %52 = vmatpush1.msra.mxu0 0.0
  %53 = vmatprep.subr.mxu0 0.0
  %54 = vmatpush1.msra.mxu0 0.0
  %55 = vmatprep.subr.mxu0 0.0
  %56 = vmatpush1.msra.mxu0 0.0
  %57 = vmatprep.subr.mxu0 0.0
  %58 = vmatpush1.msra.mxu0 0.0
  %59 = vmatprep.subr.mxu0 0.0
  %60 = vmatpush1.msra.mxu0 0.0
  %61 = vmatprep.subr.mxu0 0.0
  %62 = vmatpush1.msra.mxu0 %v23
  %63 = vmatprep.subr.mxu0 0.0
  %64 = vmatpush1.msra.mxu0 %v22
  %65 = vmatprep.subr.mxu0 0.0
  %66 = vmatpush1.msra.mxu0 %v21
  %67 = vmatprep.subr.mxu0 0.0
  %68 = vmatpush1.msra.mxu0 %v20
  %69 = vmatprep.subr.mxu0 0.0
  %70 = vmatpush2.msra.mxu0 0.0
  %71 = vmatprep.subr.mxu0 0.0
  %72 = vmatpush2.msra.mxu0 0.0
  %73 = vmatprep.subr.mxu0 0.0
  %74 = vmatpush2.msra.mxu0 0.0
  %75 = vmatprep.subr.mxu0 0.0
  %76 = vmatpush2.msra.mxu0 0.0
  %77 = vmatprep.subr.mxu0 0.0
  %78 = vmatpush2.msra.mxu0 0.0
  %79 = vmatprep.subr.mxu0 0.0
  %80 = vmatpush2.msra.mxu0 0.0
  %81 = vmatprep.subr.mxu0 0.0
  %82 = vmatpush2.msra.mxu0 0.0
  %83 = vmatprep.subr.mxu0 0.0
  %84 = vmatpush2.msra.mxu0 0.0
  %85 = vmatprep.subr.mxu0 0.0
  %86 = vmatpush2.msra.mxu0 0.0
  %87 = vmatprep.subr.mxu0 0.0
  %88 = vmatpush2.msra.mxu0 0.0
  %89 = vmatprep.subr.mxu0 0.0
  %90 = vmatpush2.msra.mxu0 0.0
  %91 = vmatprep.subr.mxu0 0.0
  %92 = vmatpush2.msra.mxu0 0.0
  %93 = vmatprep.subr.mxu0 0.0
  %94 = vmatpush2.msra.mxu0 0.0
  %95 = vmatprep.subr.mxu0 0.0
  %96 = vmatpush2.msra.mxu0 0.0
  %97 = vmatprep.subr.mxu0 0.0
  %98 = vmatpush2.msra.mxu0 0.0
  %99 = vmatprep.subr.mxu0 0.0
  %100 = vmatpush2.msra.mxu0 0.0
  %101 = vmatprep.mubr.f32.mxu0 0.0
  %102 = vmatmul.mubr.f32.gmra.mxu0 %v35
  %v103 = vpop.f32.mrf.mxu0
  %v104 = vadd.f32 %v33, %v103
  %v105 = vpop.f32.mrf.mxu0
  %106 = vdwg.mxu0
  %v108 = vsel %vm34, %v104, 0
  %110 = vmatprep.subr.mxu0 0.0
  %111 = vmatpush1.msra.mxu0 0.0
  %112 = vmatprep.subr.mxu0 0.0
  %113 = vmatpush1.msra.mxu0 0.0
  %114 = vmatprep.subr.mxu0 0.0
  %115 = vmatpush1.msra.mxu0 0.0
  %116 = vmatprep.subr.mxu0 0.0
  %117 = vmatpush1.msra.mxu0 0.0
  %118 = vmatprep.subr.mxu0 0.0
  %119 = vmatpush1.msra.mxu0 0.0
  %120 = vmatprep.subr.mxu0 0.0
  %121 = vmatpush1.msra.mxu0 0.0
  %122 = vmatprep.subr.mxu0 0.0
  %123 = vmatpush1.msra.mxu0 0.0
  %124 = vmatprep.subr.mxu0 0.0
  %125 = vmatpush1.msra.mxu0 0.0
  %126 = vmatprep.subr.mxu0 0.0
  %127 = vmatpush1.msra.mxu0 0.0
  %128 = vmatprep.subr.mxu0 0.0
  %129 = vmatpush1.msra.mxu0 0.0
  %130 = vmatprep.subr.mxu0 0.0
  %131 = vmatpush1.msra.mxu0 0.0
  %132 = vmatprep.subr.mxu0 0.0
  %133 = vmatpush1.msra.mxu0 0.0
  %134 = vmatprep.subr.mxu0 0.0
  %135 = vmatpush1.msra.mxu0 %v19
  %136 = vmatprep.subr.mxu0 0.0
  %137 = vmatpush1.msra.mxu0 %v18
  %138 = vmatprep.subr.mxu0 0.0
  %139 = vmatpush1.msra.mxu0 %v17
  %140 = vmatprep.subr.mxu0 0.0
  %141 = vmatpush1.msra.mxu0 %v16
  %142 = vmatprep.subr.mxu0 0.0
  %143 = vmatpush2.msra.mxu0 0.0
  %144 = vmatprep.subr.mxu0 0.0
  %145 = vmatpush2.msra.mxu0 0.0
  %146 = vmatprep.subr.mxu0 0.0
  %147 = vmatpush2.msra.mxu0 0.0
  %148 = vmatprep.subr.mxu0 0.0
  %149 = vmatpush2.msra.mxu0 0.0
  %150 = vmatprep.subr.mxu0 0.0
  %151 = vmatpush2.msra.mxu0 0.0
  %152 = vmatprep.subr.mxu0 0.0
  %153 = vmatpush2.msra.mxu0 0.0
  %154 = vmatprep.subr.mxu0 0.0
  %155 = vmatpush2.msra.mxu0 0.0
  %156 = vmatprep.subr.mxu0 0.0
  %157 = vmatpush2.msra.mxu0 0.0
  %158 = vmatprep.subr.mxu0 0.0
  %159 = vmatpush2.msra.mxu0 0.0
  %160 = vmatprep.subr.mxu0 0.0
  %161 = vmatpush2.msra.mxu0 0.0
  %162 = vmatprep.subr.mxu0 0.0
  %163 = vmatpush2.msra.mxu0 0.0
  %164 = vmatprep.subr.mxu0 0.0
  %165 = vmatpush2.msra.mxu0 0.0
  %166 = vmatprep.subr.mxu0 0.0
  %167 = vmatpush2.msra.mxu0 0.0
  %168 = vmatprep.subr.mxu0 0.0
  %169 = vmatpush2.msra.mxu0 0.0
  %170 = vmatprep.subr.mxu0 0.0
  %171 = vmatpush2.msra.mxu0 0.0
  %172 = vmatprep.subr.mxu0 0.0
  %173 = vmatpush2.msra.mxu0 0.0
  %174 = vmatprep.mubr.f32.mxu0 0.0
  %175 = vmatmul.mubr.f32.gmra.mxu0 %v108
  %v176 = vpop.f32.mrf.mxu0
  %v177 = vadd.f32 0.0, %v176
  %v178 = vpop.f32.mrf.mxu0
  %179 = vdwg.mxu0
  %v180 = vtanh.pop %v177
  %v181 = vadd.f32 %v104, %v180
  %s182 = scalar_lea.vmem %s3, 2
  %183 = vst.msk [vmem:[%s182] sm:$0x3] %vm31, %v181
  %s184 = scalar_lea.vmem %s0, 2
  %v185 = vld [vmem:[%s184] sm:$0x3]
  %v187 = vsel %vm34, %v181, 0
  %189 = vmatprep.subr.mxu0 0.0
  %190 = vmatpush1.msra.mxu0 0.0
  %191 = vmatprep.subr.mxu0 0.0
  %192 = vmatpush1.msra.mxu0 0.0
  %193 = vmatprep.subr.mxu0 0.0
  %194 = vmatpush1.msra.mxu0 0.0
  %195 = vmatprep.subr.mxu0 0.0
  %196 = vmatpush1.msra.mxu0 0.0
  %197 = vmatprep.subr.mxu0 0.0
  %198 = vmatpush1.msra.mxu0 0.0
  %199 = vmatprep.subr.mxu0 0.0
  %200 = vmatpush1.msra.mxu0 0.0
  %201 = vmatprep.subr.mxu0 0.0
  %202 = vmatpush1.msra.mxu0 0.0
  %203 = vmatprep.subr.mxu0 0.0
  %204 = vmatpush1.msra.mxu0 0.0
  %205 = vmatprep.subr.mxu0 0.0
  %206 = vmatpush1.msra.mxu0 0.0
  %207 = vmatprep.subr.mxu0 0.0
  %208 = vmatpush1.msra.mxu0 0.0
  %209 = vmatprep.subr.mxu0 0.0
  %210 = vmatpush1.msra.mxu0 0.0
  %211 = vmatprep.subr.mxu0 0.0
  %212 = vmatpush1.msra.mxu0 0.0
  %213 = vmatprep.subr.mxu0 0.0
  %214 = vmatpush1.msra.mxu0 %v23
  %215 = vmatprep.subr.mxu0 0.0
  %216 = vmatpush1.msra.mxu0 %v22
  %217 = vmatprep.subr.mxu0 0.0
  %218 = vmatpush1.msra.mxu0 %v21
  %219 = vmatprep.subr.mxu0 0.0
  %220 = vmatpush1.msra.mxu0 %v20
  %221 = vmatprep.subr.mxu0 0.0
  %222 = vmatpush2.msra.mxu0 0.0
  %223 = vmatprep.subr.mxu0 0.0
  %224 = vmatpush2.msra.mxu0 0.0
  %225 = vmatprep.subr.mxu0 0.0
  %226 = vmatpush2.msra.mxu0 0.0
  %227 = vmatprep.subr.mxu0 0.0
  %228 = vmatpush2.msra.mxu0 0.0
  %229 = vmatprep.subr.mxu0 0.0
  %230 = vmatpush2.msra.mxu0 0.0
  %231 = vmatprep.subr.mxu0 0.0
  %232 = vmatpush2.msra.mxu0 0.0
  %233 = vmatprep.subr.mxu0 0.0
  %234 = vmatpush2.msra.mxu0 0.0
  %235 = vmatprep.subr.mxu0 0.0
  %236 = vmatpush2.msra.mxu0 0.0
  %237 = vmatprep.subr.mxu0 0.0
  %238 = vmatpush2.msra.mxu0 0.0
  %239 = vmatprep.subr.mxu0 0.0
  %240 = vmatpush2.msra.mxu0 0.0
  %241 = vmatprep.subr.mxu0 0.0
  %242 = vmatpush2.msra.mxu0 0.0
  %243 = vmatprep.subr.mxu0 0.0
  %244 = vmatpush2.msra.mxu0 0.0
  %245 = vmatprep.subr.mxu0 0.0
  %246 = vmatpush2.msra.mxu0 0.0
  %247 = vmatprep.subr.mxu0 0.0
  %248 = vmatpush2.msra.mxu0 0.0
  %249 = vmatprep.subr.mxu0 0.0
  %250 = vmatpush2.msra.mxu0 0.0
  %251 = vmatprep.subr.mxu0 0.0
  %252 = vmatpush2.msra.mxu0 0.0
  %253 = vmatprep.mubr.f32.mxu0 0.0
  %254 = vmatmul.mubr.f32.gmra.mxu0 %v187
  %v255 = vpop.f32.mrf.mxu0
  %v256 = vadd.f32 %v185, %v255
  %v257 = vpop.f32.mrf.mxu0
  %258 = vdwg.mxu0
  %v260 = vsel %vm34, %v256, 0
  %262 = vmatprep.subr.mxu0 0.0
  %263 = vmatpush1.msra.mxu0 0.0
  %264 = vmatprep.subr.mxu0 0.0
  %265 = vmatpush1.msra.mxu0 0.0
  %266 = vmatprep.subr.mxu0 0.0
  %267 = vmatpush1.msra.mxu0 0.0
  %268 = vmatprep.subr.mxu0 0.0
  %269 = vmatpush1.msra.mxu0 0.0
  %270 = vmatprep.subr.mxu0 0.0
  %271 = vmatpush1.msra.mxu0 0.0
  %272 = vmatprep.subr.mxu0 0.0
  %273 = vmatpush1.msra.mxu0 0.0
  %274 = vmatprep.subr.mxu0 0.0
  %275 = vmatpush1.msra.mxu0 0.0
  %276 = vmatprep.subr.mxu0 0.0
  %277 = vmatpush1.msra.mxu0 0.0
  %278 = vmatprep.subr.mxu0 0.0
  %279 = vmatpush1.msra.mxu0 0.0
  %280 = vmatprep.subr.mxu0 0.0
  %281 = vmatpush1.msra.mxu0 0.0
  %282 = vmatprep.subr.mxu0 0.0
  %283 = vmatpush1.msra.mxu0 0.0
  %284 = vmatprep.subr.mxu0 0.0
  %285 = vmatpush1.msra.mxu0 0.0
  %286 = vmatprep.subr.mxu0 0.0
  %287 = vmatpush1.msra.mxu0 %v19
  %288 = vmatprep.subr.mxu0 0.0
  %289 = vmatpush1.msra.mxu0 %v18
  %290 = vmatprep.subr.mxu0 0.0
  %291 = vmatpush1.msra.mxu0 %v17
  %292 = vmatprep.subr.mxu0 0.0
  %293 = vmatpush1.msra.mxu0 %v16
  %294 = vmatprep.subr.mxu0 0.0
  %295 = vmatpush2.msra.mxu0 0.0
  %296 = vmatprep.subr.mxu0 0.0
  %297 = vmatpush2.msra.mxu0 0.0
  %298 = vmatprep.subr.mxu0 0.0
  %299 = vmatpush2.msra.mxu0 0.0
  %300 = vmatprep.subr.mxu0 0.0
  %301 = vmatpush2.msra.mxu0 0.0
  %302 = vmatprep.subr.mxu0 0.0
  %303 = vmatpush2.msra.mxu0 0.0
  %304 = vmatprep.subr.mxu0 0.0
  %305 = vmatpush2.msra.mxu0 0.0
  %306 = vmatprep.subr.mxu0 0.0
  %307 = vmatpush2.msra.mxu0 0.0
  %308 = vmatprep.subr.mxu0 0.0
  %309 = vmatpush2.msra.mxu0 0.0
  %310 = vmatprep.subr.mxu0 0.0
  %311 = vmatpush2.msra.mxu0 0.0
  %312 = vmatprep.subr.mxu0 0.0
  %313 = vmatpush2.msra.mxu0 0.0
  %314 = vmatprep.subr.mxu0 0.0
  %315 = vmatpush2.msra.mxu0 0.0
  %316 = vmatprep.subr.mxu0 0.0
  %317 = vmatpush2.msra.mxu0 0.0
  %318 = vmatprep.subr.mxu0 0.0
  %319 = vmatpush2.msra.mxu0 0.0
  %320 = vmatprep.subr.mxu0 0.0
  %321 = vmatpush2.msra.mxu0 0.0
  %322 = vmatprep.subr.mxu0 0.0
  %323 = vmatpush2.msra.mxu0 0.0
  %324 = vmatprep.subr.mxu0 0.0
  %325 = vmatpush2.msra.mxu0 0.0
  %326 = vmatprep.mubr.f32.mxu0 0.0
  %327 = vmatmul.mubr.f32.gmra.mxu0 %v260
  %v328 = vpop.f32.mrf.mxu0
  %v329 = vadd.f32 0.0, %v328
  %v330 = vpop.f32.mrf.mxu0
  %331 = vdwg.mxu0
  %v332 = vtanh.pop %v329
  %v333 = vadd.f32 %v256, %v332
  %s334 = scalar_lea.vmem %s3, 4
  %335 = vst.msk [vmem:[%s334] sm:$0x3] %vm31, %v333
  %s336 = scalar_lea.vmem %s0, 4
  %v337 = vld [vmem:[%s336] sm:$0x3]
  %v339 = vsel %vm34, %v333, 0
  %341 = vmatprep.subr.mxu0 0.0
  %342 = vmatpush1.msra.mxu0 0.0
  %343 = vmatprep.subr.mxu0 0.0
  %344 = vmatpush1.msra.mxu0 0.0
  %345 = vmatprep.subr.mxu0 0.0
  %346 = vmatpush1.msra.mxu0 0.0
  %347 = vmatprep.subr.mxu0 0.0
  %348 = vmatpush1.msra.mxu0 0.0
  %349 = vmatprep.subr.mxu0 0.0
  %350 = vmatpush1.msra.mxu0 0.0
  %351 = vmatprep.subr.mxu0 0.0
  %352 = vmatpush1.msra.mxu0 0.0
  %353 = vmatprep.subr.mxu0 0.0
  %354 = vmatpush1.msra.mxu0 0.0
  %355 = vmatprep.subr.mxu0 0.0
  %356 = vmatpush1.msra.mxu0 0.0
  %357 = vmatprep.subr.mxu0 0.0
  %358 = vmatpush1.msra.mxu0 0.0
  %359 = vmatprep.subr.mxu0 0.0
  %360 = vmatpush1.msra.mxu0 0.0
  %361 = vmatprep.subr.mxu0 0.0
  %362 = vmatpush1.msra.mxu0 0.0
  %363 = vmatprep.subr.mxu0 0.0
  %364 = vmatpush1.msra.mxu0 0.0
  %365 = vmatprep.subr.mxu0 0.0
  %366 = vmatpush1.msra.mxu0 %v23
  %367 = vmatprep.subr.mxu0 0.0
  %368 = vmatpush1.msra.mxu0 %v22
  %369 = vmatprep.subr.mxu0 0.0
  %370 = vmatpush1.msra.mxu0 %v21
  %371 = vmatprep.subr.mxu0 0.0
  %372 = vmatpush1.msra.mxu0 %v20
  %373 = vmatprep.subr.mxu0 0.0
  %374 = vmatpush2.msra.mxu0 0.0
  %375 = vmatprep.subr.mxu0 0.0
  %376 = vmatpush2.msra.mxu0 0.0
  %377 = vmatprep.subr.mxu0 0.0
  %378 = vmatpush2.msra.mxu0 0.0
  %379 = vmatprep.subr.mxu0 0.0
  %380 = vmatpush2.msra.mxu0 0.0
  %381 = vmatprep.subr.mxu0 0.0
  %382 = vmatpush2.msra.mxu0 0.0
  %383 = vmatprep.subr.mxu0 0.0
  %384 = vmatpush2.msra.mxu0 0.0
  %385 = vmatprep.subr.mxu0 0.0
  %386 = vmatpush2.msra.mxu0 0.0
  %387 = vmatprep.subr.mxu0 0.0
  %388 = vmatpush2.msra.mxu0 0.0
  %389 = vmatprep.subr.mxu0 0.0
  %390 = vmatpush2.msra.mxu0 0.0
  %391 = vmatprep.subr.mxu0 0.0
  %392 = vmatpush2.msra.mxu0 0.0
  %393 = vmatprep.subr.mxu0 0.0
  %394 = vmatpush2.msra.mxu0 0.0
  %395 = vmatprep.subr.mxu0 0.0
  %396 = vmatpush2.msra.mxu0 0.0
  %397 = vmatprep.subr.mxu0 0.0
  %398 = vmatpush2.msra.mxu0 0.0
  %399 = vmatprep.subr.mxu0 0.0
  %400 = vmatpush2.msra.mxu0 0.0
  %401 = vmatprep.subr.mxu0 0.0
  %402 = vmatpush2.msra.mxu0 0.0
  %403 = vmatprep.subr.mxu0 0.0
  %404 = vmatpush2.msra.mxu0 0.0
  %405 = vmatprep.mubr.f32.mxu0 0.0
  %406 = vmatmul.mubr.f32.gmra.mxu0 %v339
  %v407 = vpop.f32.mrf.mxu0
  %v408 = vadd.f32 %v337, %v407
  %v409 = vpop.f32.mrf.mxu0
  %410 = vdwg.mxu0
  %v412 = vsel %vm34, %v408, 0
  %414 = vmatprep.subr.mxu0 0.0
  %415 = vmatpush1.msra.mxu0 0.0
  %416 = vmatprep.subr.mxu0 0.0
  %417 = vmatpush1.msra.mxu0 0.0
  %418 = vmatprep.subr.mxu0 0.0
  %419 = vmatpush1.msra.mxu0 0.0
  %420 = vmatprep.subr.mxu0 0.0
  %421 = vmatpush1.msra.mxu0 0.0
  %422 = vmatprep.subr.mxu0 0.0
  %423 = vmatpush1.msra.mxu0 0.0
  %424 = vmatprep.subr.mxu0 0.0
  %425 = vmatpush1.msra.mxu0 0.0
  %426 = vmatprep.subr.mxu0 0.0
  %427 = vmatpush1.msra.mxu0 0.0
  %428 = vmatprep.subr.mxu0 0.0
  %429 = vmatpush1.msra.mxu0 0.0
  %430 = vmatprep.subr.mxu0 0.0
  %431 = vmatpush1.msra.mxu0 0.0
  %432 = vmatprep.subr.mxu0 0.0
  %433 = vmatpush1.msra.mxu0 0.0
  %434 = vmatprep.subr.mxu0 0.0
  %435 = vmatpush1.msra.mxu0 0.0
  %436 = vmatprep.subr.mxu0 0.0
  %437 = vmatpush1.msra.mxu0 0.0
  %438 = vmatprep.subr.mxu0 0.0
  %439 = vmatpush1.msra.mxu0 %v19
  %440 = vmatprep.subr.mxu0 0.0
  %441 = vmatpush1.msra.mxu0 %v18
  %442 = vmatprep.subr.mxu0 0.0
  %443 = vmatpush1.msra.mxu0 %v17
  %444 = vmatprep.subr.mxu0 0.0
  %445 = vmatpush1.msra.mxu0 %v16
  %446 = vmatprep.subr.mxu0 0.0
  %447 = vmatpush2.msra.mxu0 0.0
  %448 = vmatprep.subr.mxu0 0.0
  %449 = vmatpush2.msra.mxu0 0.0
  %450 = vmatprep.subr.mxu0 0.0
  %451 = vmatpush2.msra.mxu0 0.0
  %452 = vmatprep.subr.mxu0 0.0
  %453 = vmatpush2.msra.mxu0 0.0
  %454 = vmatprep.subr.mxu0 0.0
  %455 = vmatpush2.msra.mxu0 0.0
  %456 = vmatprep.subr.mxu0 0.0
  %457 = vmatpush2.msra.mxu0 0.0
  %458 = vmatprep.subr.mxu0 0.0
  %459 = vmatpush2.msra.mxu0 0.0
  %460 = vmatprep.subr.mxu0 0.0
  %461 = vmatpush2.msra.mxu0 0.0
  %462 = vmatprep.subr.mxu0 0.0
  %463 = vmatpush2.msra.mxu0 0.0
  %464 = vmatprep.subr.mxu0 0.0
  %465 = vmatpush2.msra.mxu0 0.0
  %466 = vmatprep.subr.mxu0 0.0
  %467 = vmatpush2.msra.mxu0 0.0
  %468 = vmatprep.subr.mxu0 0.0
  %469 = vmatpush2.msra.mxu0 0.0
  %470 = vmatprep.subr.mxu0 0.0
  %471 = vmatpush2.msra.mxu0 0.0
  %472 = vmatprep.subr.mxu0 0.0
  %473 = vmatpush2.msra.mxu0 0.0
  %474 = vmatprep.subr.mxu0 0.0
  %475 = vmatpush2.msra.mxu0 0.0
  %476 = vmatprep.subr.mxu0 0.0
  %477 = vmatpush2.msra.mxu0 0.0
  %478 = vmatprep.mubr.f32.mxu0 0.0
  %479 = vmatmul.mubr.f32.gmra.mxu0 %v412
  %v480 = vpop.f32.mrf.mxu0
  %v481 = vadd.f32 0.0, %v480
  %v482 = vpop.f32.mrf.mxu0
  %483 = vdwg.mxu0
  %v484 = vtanh.pop %v481
  %v485 = vadd.f32 %v408, %v484
  %s486 = scalar_lea.vmem %s3, 6
  %487 = vst.msk [vmem:[%s486] sm:$0x3] %vm31, %v485
  %s488 = scalar_lea.vmem %s0, 6
  %v489 = vld [vmem:[%s488] sm:$0x3]
  %v491 = vsel %vm34, %v485, 0
  %493 = vmatprep.subr.mxu0 0.0
  %494 = vmatpush1.msra.mxu0 0.0
  %495 = vmatprep.subr.mxu0 0.0
  %496 = vmatpush1.msra.mxu0 0.0
  %497 = vmatprep.subr.mxu0 0.0
  %498 = vmatpush1.msra.mxu0 0.0
  %499 = vmatprep.subr.mxu0 0.0
  %500 = vmatpush1.msra.mxu0 0.0
  %501 = vmatprep.subr.mxu0 0.0
  %502 = vmatpush1.msra.mxu0 0.0
  %503 = vmatprep.subr.mxu0 0.0
  %504 = vmatpush1.msra.mxu0 0.0
  %505 = vmatprep.subr.mxu0 0.0
  %506 = vmatpush1.msra.mxu0 0.0
  %507 = vmatprep.subr.mxu0 0.0
  %508 = vmatpush1.msra.mxu0 0.0
  %509 = vmatprep.subr.mxu0 0.0
  %510 = vmatpush1.msra.mxu0 0.0
  %511 = vmatprep.subr.mxu0 0.0
  %512 = vmatpush1.msra.mxu0 0.0
  %513 = vmatprep.subr.mxu0 0.0
  %514 = vmatpush1.msra.mxu0 0.0
  %515 = vmatprep.subr.mxu0 0.0
  %516 = vmatpush1.msra.mxu0 0.0
  %517 = vmatprep.subr.mxu0 0.0
  %518 = vmatpush1.msra.mxu0 %v23
  %519 = vmatprep.subr.mxu0 0.0
  %520 = vmatpush1.msra.mxu0 %v22
  %521 = vmatprep.subr.mxu0 0.0
  %522 = vmatpush1.msra.mxu0 %v21
  %523 = vmatprep.subr.mxu0 0.0
  %524 = vmatpush1.msra.mxu0 %v20
  %525 = vmatprep.subr.mxu0 0.0
  %526 = vmatpush2.msra.mxu0 0.0
  %527 = vmatprep.subr.mxu0 0.0
  %528 = vmatpush2.msra.mxu0 0.0
  %529 = vmatprep.subr.mxu0 0.0
  %530 = vmatpush2.msra.mxu0 0.0
  %531 = vmatprep.subr.mxu0 0.0
  %532 = vmatpush2.msra.mxu0 0.0
  %533 = vmatprep.subr.mxu0 0.0
  %534 = vmatpush2.msra.mxu0 0.0
  %535 = vmatprep.subr.mxu0 0.0
  %536 = vmatpush2.msra.mxu0 0.0
  %537 = vmatprep.subr.mxu0 0.0
  %538 = vmatpush2.msra.mxu0 0.0
  %539 = vmatprep.subr.mxu0 0.0
  %540 = vmatpush2.msra.mxu0 0.0
  %541 = vmatprep.subr.mxu0 0.0
  %542 = vmatpush2.msra.mxu0 0.0
  %543 = vmatprep.subr.mxu0 0.0
  %544 = vmatpush2.msra.mxu0 0.0
  %545 = vmatprep.subr.mxu0 0.0
  %546 = vmatpush2.msra.mxu0 0.0
  %547 = vmatprep.subr.mxu0 0.0
  %548 = vmatpush2.msra.mxu0 0.0
  %549 = vmatprep.subr.mxu0 0.0
  %550 = vmatpush2.msra.mxu0 0.0
  %551 = vmatprep.subr.mxu0 0.0
  %552 = vmatpush2.msra.mxu0 0.0
  %553 = vmatprep.subr.mxu0 0.0
  %554 = vmatpush2.msra.mxu0 0.0
  %555 = vmatprep.subr.mxu0 0.0
  %556 = vmatpush2.msra.mxu0 0.0
  %557 = vmatprep.mubr.f32.mxu0 0.0
  %558 = vmatmul.mubr.f32.gmra.mxu0 %v491
  %v559 = vpop.f32.mrf.mxu0
  %v560 = vadd.f32 %v489, %v559
  %v561 = vpop.f32.mrf.mxu0
  %562 = vdwg.mxu0
  %v564 = vsel %vm34, %v560, 0
  %566 = vmatprep.subr.mxu0 0.0
  %567 = vmatpush1.msra.mxu0 0.0
  %568 = vmatprep.subr.mxu0 0.0
  %569 = vmatpush1.msra.mxu0 0.0
  %570 = vmatprep.subr.mxu0 0.0
  %571 = vmatpush1.msra.mxu0 0.0
  %572 = vmatprep.subr.mxu0 0.0
  %573 = vmatpush1.msra.mxu0 0.0
  %574 = vmatprep.subr.mxu0 0.0
  %575 = vmatpush1.msra.mxu0 0.0
  %576 = vmatprep.subr.mxu0 0.0
  %577 = vmatpush1.msra.mxu0 0.0
  %578 = vmatprep.subr.mxu0 0.0
  %579 = vmatpush1.msra.mxu0 0.0
  %580 = vmatprep.subr.mxu0 0.0
  %581 = vmatpush1.msra.mxu0 0.0
  %582 = vmatprep.subr.mxu0 0.0
  %583 = vmatpush1.msra.mxu0 0.0
  %584 = vmatprep.subr.mxu0 0.0
  %585 = vmatpush1.msra.mxu0 0.0
  %586 = vmatprep.subr.mxu0 0.0
  %587 = vmatpush1.msra.mxu0 0.0
  %588 = vmatprep.subr.mxu0 0.0
  %589 = vmatpush1.msra.mxu0 0.0
  %590 = vmatprep.subr.mxu0 0.0
  %591 = vmatpush1.msra.mxu0 %v19
  %592 = vmatprep.subr.mxu0 0.0
  %593 = vmatpush1.msra.mxu0 %v18
  %594 = vmatprep.subr.mxu0 0.0
  %595 = vmatpush1.msra.mxu0 %v17
  %596 = vmatprep.subr.mxu0 0.0
  %597 = vmatpush1.msra.mxu0 %v16
  %598 = vmatprep.subr.mxu0 0.0
  %599 = vmatpush2.msra.mxu0 0.0
  %600 = vmatprep.subr.mxu0 0.0
  %601 = vmatpush2.msra.mxu0 0.0
  %602 = vmatprep.subr.mxu0 0.0
  %603 = vmatpush2.msra.mxu0 0.0
  %604 = vmatprep.subr.mxu0 0.0
  %605 = vmatpush2.msra.mxu0 0.0
  %606 = vmatprep.subr.mxu0 0.0
  %607 = vmatpush2.msra.mxu0 0.0
  %608 = vmatprep.subr.mxu0 0.0
  %609 = vmatpush2.msra.mxu0 0.0
  %610 = vmatprep.subr.mxu0 0.0
  %611 = vmatpush2.msra.mxu0 0.0
  %612 = vmatprep.subr.mxu0 0.0
  %613 = vmatpush2.msra.mxu0 0.0
  %614 = vmatprep.subr.mxu0 0.0
  %615 = vmatpush2.msra.mxu0 0.0
  %616 = vmatprep.subr.mxu0 0.0
  %617 = vmatpush2.msra.mxu0 0.0
  %618 = vmatprep.subr.mxu0 0.0
  %619 = vmatpush2.msra.mxu0 0.0
  %620 = vmatprep.subr.mxu0 0.0
  %621 = vmatpush2.msra.mxu0 0.0
  %622 = vmatprep.subr.mxu0 0.0
  %623 = vmatpush2.msra.mxu0 0.0
  %624 = vmatprep.subr.mxu0 0.0
  %625 = vmatpush2.msra.mxu0 0.0
  %626 = vmatprep.subr.mxu0 0.0
  %627 = vmatpush2.msra.mxu0 0.0
  %628 = vmatprep.subr.mxu0 0.0
  %629 = vmatpush2.msra.mxu0 0.0
  %630 = vmatprep.mubr.f32.mxu0 0.0
  %631 = vmatmul.mubr.f32.gmra.mxu0 %v564
  %v632 = vpop.f32.mrf.mxu0
  %v633 = vadd.f32 0.0, %v632
  %v634 = vpop.f32.mrf.mxu0
  %635 = vdwg.mxu0
  %v636 = vtanh.pop %v633
  %v637 = vadd.f32 %v560, %v636
  %s638 = scalar_lea.vmem %s3, 8
  %639 = vst.msk [vmem:[%s638] sm:$0x3] %vm31, %v637
  %s640 = scalar_lea.vmem %s0, 8
  %v641 = vld [vmem:[%s640] sm:$0x3]
  %v643 = vsel %vm34, %v637, 0
  %645 = vmatprep.subr.mxu0 0.0
  %646 = vmatpush1.msra.mxu0 0.0
  %647 = vmatprep.subr.mxu0 0.0
  %648 = vmatpush1.msra.mxu0 0.0
  %649 = vmatprep.subr.mxu0 0.0
  %650 = vmatpush1.msra.mxu0 0.0
  %651 = vmatprep.subr.mxu0 0.0
  %652 = vmatpush1.msra.mxu0 0.0
  %653 = vmatprep.subr.mxu0 0.0
  %654 = vmatpush1.msra.mxu0 0.0
  %655 = vmatprep.subr.mxu0 0.0
  %656 = vmatpush1.msra.mxu0 0.0
  %657 = vmatprep.subr.mxu0 0.0
  %658 = vmatpush1.msra.mxu0 0.0
  %659 = vmatprep.subr.mxu0 0.0
  %660 = vmatpush1.msra.mxu0 0.0
  %661 = vmatprep.subr.mxu0 0.0
  %662 = vmatpush1.msra.mxu0 0.0
  %663 = vmatprep.subr.mxu0 0.0
  %664 = vmatpush1.msra.mxu0 0.0
  %665 = vmatprep.subr.mxu0 0.0
  %666 = vmatpush1.msra.mxu0 0.0
  %667 = vmatprep.subr.mxu0 0.0
  %668 = vmatpush1.msra.mxu0 0.0
  %669 = vmatprep.subr.mxu0 0.0
  %670 = vmatpush1.msra.mxu0 %v23
  %671 = vmatprep.subr.mxu0 0.0
  %672 = vmatpush1.msra.mxu0 %v22
  %673 = vmatprep.subr.mxu0 0.0
  %674 = vmatpush1.msra.mxu0 %v21
  %675 = vmatprep.subr.mxu0 0.0
  %676 = vmatpush1.msra.mxu0 %v20
  %677 = vmatprep.subr.mxu0 0.0
  %678 = vmatpush2.msra.mxu0 0.0
  %679 = vmatprep.subr.mxu0 0.0
  %680 = vmatpush2.msra.mxu0 0.0
  %681 = vmatprep.subr.mxu0 0.0
  %682 = vmatpush2.msra.mxu0 0.0
  %683 = vmatprep.subr.mxu0 0.0
  %684 = vmatpush2.msra.mxu0 0.0
  %685 = vmatprep.subr.mxu0 0.0
  %686 = vmatpush2.msra.mxu0 0.0
  %687 = vmatprep.subr.mxu0 0.0
  %688 = vmatpush2.msra.mxu0 0.0
  %689 = vmatprep.subr.mxu0 0.0
  %690 = vmatpush2.msra.mxu0 0.0
  %691 = vmatprep.subr.mxu0 0.0
  %692 = vmatpush2.msra.mxu0 0.0
  %693 = vmatprep.subr.mxu0 0.0
  %694 = vmatpush2.msra.mxu0 0.0
  %695 = vmatprep.subr.mxu0 0.0
  %696 = vmatpush2.msra.mxu0 0.0
  %697 = vmatprep.subr.mxu0 0.0
  %698 = vmatpush2.msra.mxu0 0.0
  %699 = vmatprep.subr.mxu0 0.0
  %700 = vmatpush2.msra.mxu0 0.0
  %701 = vmatprep.subr.mxu0 0.0
  %702 = vmatpush2.msra.mxu0 0.0
  %703 = vmatprep.subr.mxu0 0.0
  %704 = vmatpush2.msra.mxu0 0.0
  %705 = vmatprep.subr.mxu0 0.0
  %706 = vmatpush2.msra.mxu0 0.0
  %707 = vmatprep.subr.mxu0 0.0
  %708 = vmatpush2.msra.mxu0 0.0
  %709 = vmatprep.mubr.f32.mxu0 0.0
  %710 = vmatmul.mubr.f32.gmra.mxu0 %v643
  %v711 = vpop.f32.mrf.mxu0
  %v712 = vadd.f32 %v641, %v711
  %v713 = vpop.f32.mrf.mxu0
  %714 = vdwg.mxu0
  %v716 = vsel %vm34, %v712, 0
  %718 = vmatprep.subr.mxu0 0.0
  %719 = vmatpush1.msra.mxu0 0.0
  %720 = vmatprep.subr.mxu0 0.0
  %721 = vmatpush1.msra.mxu0 0.0
  %722 = vmatprep.subr.mxu0 0.0
  %723 = vmatpush1.msra.mxu0 0.0
  %724 = vmatprep.subr.mxu0 0.0
  %725 = vmatpush1.msra.mxu0 0.0
  %726 = vmatprep.subr.mxu0 0.0
  %727 = vmatpush1.msra.mxu0 0.0
  %728 = vmatprep.subr.mxu0 0.0
  %729 = vmatpush1.msra.mxu0 0.0
  %730 = vmatprep.subr.mxu0 0.0
  %731 = vmatpush1.msra.mxu0 0.0
  %732 = vmatprep.subr.mxu0 0.0
  %733 = vmatpush1.msra.mxu0 0.0
  %734 = vmatprep.subr.mxu0 0.0
  %735 = vmatpush1.msra.mxu0 0.0
  %736 = vmatprep.subr.mxu0 0.0
  %737 = vmatpush1.msra.mxu0 0.0
  %738 = vmatprep.subr.mxu0 0.0
  %739 = vmatpush1.msra.mxu0 0.0
  %740 = vmatprep.subr.mxu0 0.0
  %741 = vmatpush1.msra.mxu0 0.0
  %742 = vmatprep.subr.mxu0 0.0
  %743 = vmatpush1.msra.mxu0 %v19
  %744 = vmatprep.subr.mxu0 0.0
  %745 = vmatpush1.msra.mxu0 %v18
  %746 = vmatprep.subr.mxu0 0.0
  %747 = vmatpush1.msra.mxu0 %v17
  %748 = vmatprep.subr.mxu0 0.0
  %749 = vmatpush1.msra.mxu0 %v16
  %750 = vmatprep.subr.mxu0 0.0
  %751 = vmatpush2.msra.mxu0 0.0
  %752 = vmatprep.subr.mxu0 0.0
  %753 = vmatpush2.msra.mxu0 0.0
  %754 = vmatprep.subr.mxu0 0.0
  %755 = vmatpush2.msra.mxu0 0.0
  %756 = vmatprep.subr.mxu0 0.0
  %757 = vmatpush2.msra.mxu0 0.0
  %758 = vmatprep.subr.mxu0 0.0
  %759 = vmatpush2.msra.mxu0 0.0
  %760 = vmatprep.subr.mxu0 0.0
  %761 = vmatpush2.msra.mxu0 0.0
  %762 = vmatprep.subr.mxu0 0.0
  %763 = vmatpush2.msra.mxu0 0.0
  %764 = vmatprep.subr.mxu0 0.0
  %765 = vmatpush2.msra.mxu0 0.0
  %766 = vmatprep.subr.mxu0 0.0
  %767 = vmatpush2.msra.mxu0 0.0
  %768 = vmatprep.subr.mxu0 0.0
  %769 = vmatpush2.msra.mxu0 0.0
  %770 = vmatprep.subr.mxu0 0.0
  %771 = vmatpush2.msra.mxu0 0.0
  %772 = vmatprep.subr.mxu0 0.0
  %773 = vmatpush2.msra.mxu0 0.0
  %774 = vmatprep.subr.mxu0 0.0
  %775 = vmatpush2.msra.mxu0 0.0
  %776 = vmatprep.subr.mxu0 0.0
  %777 = vmatpush2.msra.mxu0 0.0
  %778 = vmatprep.subr.mxu0 0.0
  %779 = vmatpush2.msra.mxu0 0.0
  %780 = vmatprep.subr.mxu0 0.0
  %781 = vmatpush2.msra.mxu0 0.0
  %782 = vmatprep.mubr.f32.mxu0 0.0
  %783 = vmatmul.mubr.f32.gmra.mxu0 %v716
  %v784 = vpop.f32.mrf.mxu0
  %v785 = vadd.f32 0.0, %v784
  %v786 = vpop.f32.mrf.mxu0
  %787 = vdwg.mxu0
  %v788 = vtanh.pop %v785
  %v789 = vadd.f32 %v712, %v788
  %s790 = scalar_lea.vmem %s3, 10
  %791 = vst.msk [vmem:[%s790] sm:$0x3] %vm31, %v789
  %s792 = scalar_lea.vmem %s0, 10
  %v793 = vld [vmem:[%s792] sm:$0x3]
  %v795 = vsel %vm34, %v789, 0
  %797 = vmatprep.subr.mxu0 0.0
  %798 = vmatpush1.msra.mxu0 0.0
  %799 = vmatprep.subr.mxu0 0.0
  %800 = vmatpush1.msra.mxu0 0.0
  %801 = vmatprep.subr.mxu0 0.0
  %802 = vmatpush1.msra.mxu0 0.0
  %803 = vmatprep.subr.mxu0 0.0
  %804 = vmatpush1.msra.mxu0 0.0
  %805 = vmatprep.subr.mxu0 0.0
  %806 = vmatpush1.msra.mxu0 0.0
  %807 = vmatprep.subr.mxu0 0.0
  %808 = vmatpush1.msra.mxu0 0.0
  %809 = vmatprep.subr.mxu0 0.0
  %810 = vmatpush1.msra.mxu0 0.0
  %811 = vmatprep.subr.mxu0 0.0
  %812 = vmatpush1.msra.mxu0 0.0
  %813 = vmatprep.subr.mxu0 0.0
  %814 = vmatpush1.msra.mxu0 0.0
  %815 = vmatprep.subr.mxu0 0.0
  %816 = vmatpush1.msra.mxu0 0.0
  %817 = vmatprep.subr.mxu0 0.0
  %818 = vmatpush1.msra.mxu0 0.0
  %819 = vmatprep.subr.mxu0 0.0
  %820 = vmatpush1.msra.mxu0 0.0
  %821 = vmatprep.subr.mxu0 0.0
  %822 = vmatpush1.msra.mxu0 %v23
  %823 = vmatprep.subr.mxu0 0.0
  %824 = vmatpush1.msra.mxu0 %v22
  %825 = vmatprep.subr.mxu0 0.0
  %826 = vmatpush1.msra.mxu0 %v21
  %827 = vmatprep.subr.mxu0 0.0
  %828 = vmatpush1.msra.mxu0 %v20
  %829 = vmatprep.subr.mxu0 0.0
  %830 = vmatpush2.msra.mxu0 0.0
  %831 = vmatprep.subr.mxu0 0.0
  %832 = vmatpush2.msra.mxu0 0.0
  %833 = vmatprep.subr.mxu0 0.0
  %834 = vmatpush2.msra.mxu0 0.0
  %835 = vmatprep.subr.mxu0 0.0
  %836 = vmatpush2.msra.mxu0 0.0
  %837 = vmatprep.subr.mxu0 0.0
  %838 = vmatpush2.msra.mxu0 0.0
  %839 = vmatprep.subr.mxu0 0.0
  %840 = vmatpush2.msra.mxu0 0.0
  %841 = vmatprep.subr.mxu0 0.0
  %842 = vmatpush2.msra.mxu0 0.0
  %843 = vmatprep.subr.mxu0 0.0
  %844 = vmatpush2.msra.mxu0 0.0
  %845 = vmatprep.subr.mxu0 0.0
  %846 = vmatpush2.msra.mxu0 0.0
  %847 = vmatprep.subr.mxu0 0.0
  %848 = vmatpush2.msra.mxu0 0.0
  %849 = vmatprep.subr.mxu0 0.0
  %850 = vmatpush2.msra.mxu0 0.0
  %851 = vmatprep.subr.mxu0 0.0
  %852 = vmatpush2.msra.mxu0 0.0
  %853 = vmatprep.subr.mxu0 0.0
  %854 = vmatpush2.msra.mxu0 0.0
  %855 = vmatprep.subr.mxu0 0.0
  %856 = vmatpush2.msra.mxu0 0.0
  %857 = vmatprep.subr.mxu0 0.0
  %858 = vmatpush2.msra.mxu0 0.0
  %859 = vmatprep.subr.mxu0 0.0
  %860 = vmatpush2.msra.mxu0 0.0
  %861 = vmatprep.mubr.f32.mxu0 0.0
  %862 = vmatmul.mubr.f32.gmra.mxu0 %v795
  %v863 = vpop.f32.mrf.mxu0
  %v864 = vadd.f32 %v793, %v863
  %v865 = vpop.f32.mrf.mxu0
  %866 = vdwg.mxu0
  %v868 = vsel %vm34, %v864, 0
  %870 = vmatprep.subr.mxu0 0.0
  %871 = vmatpush1.msra.mxu0 0.0
  %872 = vmatprep.subr.mxu0 0.0
  %873 = vmatpush1.msra.mxu0 0.0
  %874 = vmatprep.subr.mxu0 0.0
  %875 = vmatpush1.msra.mxu0 0.0
  %876 = vmatprep.subr.mxu0 0.0
  %877 = vmatpush1.msra.mxu0 0.0
  %878 = vmatprep.subr.mxu0 0.0
  %879 = vmatpush1.msra.mxu0 0.0
  %880 = vmatprep.subr.mxu0 0.0
  %881 = vmatpush1.msra.mxu0 0.0
  %882 = vmatprep.subr.mxu0 0.0
  %883 = vmatpush1.msra.mxu0 0.0
  %884 = vmatprep.subr.mxu0 0.0
  %885 = vmatpush1.msra.mxu0 0.0
  %886 = vmatprep.subr.mxu0 0.0
  %887 = vmatpush1.msra.mxu0 0.0
  %888 = vmatprep.subr.mxu0 0.0
  %889 = vmatpush1.msra.mxu0 0.0
  %890 = vmatprep.subr.mxu0 0.0
  %891 = vmatpush1.msra.mxu0 0.0
  %892 = vmatprep.subr.mxu0 0.0
  %893 = vmatpush1.msra.mxu0 0.0
  %894 = vmatprep.subr.mxu0 0.0
  %895 = vmatpush1.msra.mxu0 %v19
  %896 = vmatprep.subr.mxu0 0.0
  %897 = vmatpush1.msra.mxu0 %v18
  %898 = vmatprep.subr.mxu0 0.0
  %899 = vmatpush1.msra.mxu0 %v17
  %900 = vmatprep.subr.mxu0 0.0
  %901 = vmatpush1.msra.mxu0 %v16
  %902 = vmatprep.subr.mxu0 0.0
  %903 = vmatpush2.msra.mxu0 0.0
  %904 = vmatprep.subr.mxu0 0.0
  %905 = vmatpush2.msra.mxu0 0.0
  %906 = vmatprep.subr.mxu0 0.0
  %907 = vmatpush2.msra.mxu0 0.0
  %908 = vmatprep.subr.mxu0 0.0
  %909 = vmatpush2.msra.mxu0 0.0
  %910 = vmatprep.subr.mxu0 0.0
  %911 = vmatpush2.msra.mxu0 0.0
  %912 = vmatprep.subr.mxu0 0.0
  %913 = vmatpush2.msra.mxu0 0.0
  %914 = vmatprep.subr.mxu0 0.0
  %915 = vmatpush2.msra.mxu0 0.0
  %916 = vmatprep.subr.mxu0 0.0
  %917 = vmatpush2.msra.mxu0 0.0
  %918 = vmatprep.subr.mxu0 0.0
  %919 = vmatpush2.msra.mxu0 0.0
  %920 = vmatprep.subr.mxu0 0.0
  %921 = vmatpush2.msra.mxu0 0.0
  %922 = vmatprep.subr.mxu0 0.0
  %923 = vmatpush2.msra.mxu0 0.0
  %924 = vmatprep.subr.mxu0 0.0
  %925 = vmatpush2.msra.mxu0 0.0
  %926 = vmatprep.subr.mxu0 0.0
  %927 = vmatpush2.msra.mxu0 0.0
  %928 = vmatprep.subr.mxu0 0.0
  %929 = vmatpush2.msra.mxu0 0.0
  %930 = vmatprep.subr.mxu0 0.0
  %931 = vmatpush2.msra.mxu0 0.0
  %932 = vmatprep.subr.mxu0 0.0
  %933 = vmatpush2.msra.mxu0 0.0
  %934 = vmatprep.mubr.f32.mxu0 0.0
  %935 = vmatmul.mubr.f32.gmra.mxu0 %v868
  %v936 = vpop.f32.mrf.mxu0
  %v937 = vadd.f32 0.0, %v936
  %v938 = vpop.f32.mrf.mxu0
  %939 = vdwg.mxu0
  %v940 = vtanh.pop %v937
  %v941 = vadd.f32 %v864, %v940
  %s942 = scalar_lea.vmem %s3, 12
  %943 = vst.msk [vmem:[%s942] sm:$0x3] %vm31, %v941
  %s944 = scalar_lea.vmem %s0, 12
  %v945 = vld [vmem:[%s944] sm:$0x3]
  %v947 = vsel %vm34, %v941, 0
  %949 = vmatprep.subr.mxu0 0.0
  %950 = vmatpush1.msra.mxu0 0.0
  %951 = vmatprep.subr.mxu0 0.0
  %952 = vmatpush1.msra.mxu0 0.0
  %953 = vmatprep.subr.mxu0 0.0
  %954 = vmatpush1.msra.mxu0 0.0
  %955 = vmatprep.subr.mxu0 0.0
  %956 = vmatpush1.msra.mxu0 0.0
  %957 = vmatprep.subr.mxu0 0.0
  %958 = vmatpush1.msra.mxu0 0.0
  %959 = vmatprep.subr.mxu0 0.0
  %960 = vmatpush1.msra.mxu0 0.0
  %961 = vmatprep.subr.mxu0 0.0
  %962 = vmatpush1.msra.mxu0 0.0
  %963 = vmatprep.subr.mxu0 0.0
  %964 = vmatpush1.msra.mxu0 0.0
  %965 = vmatprep.subr.mxu0 0.0
  %966 = vmatpush1.msra.mxu0 0.0
  %967 = vmatprep.subr.mxu0 0.0
  %968 = vmatpush1.msra.mxu0 0.0
  %969 = vmatprep.subr.mxu0 0.0
  %970 = vmatpush1.msra.mxu0 0.0
  %971 = vmatprep.subr.mxu0 0.0
  %972 = vmatpush1.msra.mxu0 0.0
  %973 = vmatprep.subr.mxu0 0.0
  %974 = vmatpush1.msra.mxu0 %v23
  %975 = vmatprep.subr.mxu0 0.0
  %976 = vmatpush1.msra.mxu0 %v22
  %977 = vmatprep.subr.mxu0 0.0
  %978 = vmatpush1.msra.mxu0 %v21
  %979 = vmatprep.subr.mxu0 0.0
  %980 = vmatpush1.msra.mxu0 %v20
  %981 = vmatprep.subr.mxu0 0.0
  %982 = vmatpush2.msra.mxu0 0.0
  %983 = vmatprep.subr.mxu0 0.0
  %984 = vmatpush2.msra.mxu0 0.0
  %985 = vmatprep.subr.mxu0 0.0
  %986 = vmatpush2.msra.mxu0 0.0
  %987 = vmatprep.subr.mxu0 0.0
  %988 = vmatpush2.msra.mxu0 0.0
  %989 = vmatprep.subr.mxu0 0.0
  %990 = vmatpush2.msra.mxu0 0.0
  %991 = vmatprep.subr.mxu0 0.0
  %992 = vmatpush2.msra.mxu0 0.0
  %993 = vmatprep.subr.mxu0 0.0
  %994 = vmatpush2.msra.mxu0 0.0
  %995 = vmatprep.subr.mxu0 0.0
  %996 = vmatpush2.msra.mxu0 0.0
  %997 = vmatprep.subr.mxu0 0.0
  %998 = vmatpush2.msra.mxu0 0.0
  %999 = vmatprep.subr.mxu0 0.0
  %1000 = vmatpush2.msra.mxu0 0.0
  %1001 = vmatprep.subr.mxu0 0.0
  %1002 = vmatpush2.msra.mxu0 0.0
  %1003 = vmatprep.subr.mxu0 0.0
  %1004 = vmatpush2.msra.mxu0 0.0
  %1005 = vmatprep.subr.mxu0 0.0
  %1006 = vmatpush2.msra.mxu0 0.0
  %1007 = vmatprep.subr.mxu0 0.0
  %1008 = vmatpush2.msra.mxu0 0.0
  %1009 = vmatprep.subr.mxu0 0.0
  %1010 = vmatpush2.msra.mxu0 0.0
  %1011 = vmatprep.subr.mxu0 0.0
  %1012 = vmatpush2.msra.mxu0 0.0
  %1013 = vmatprep.mubr.f32.mxu0 0.0
  %1014 = vmatmul.mubr.f32.gmra.mxu0 %v947
  %v1015 = vpop.f32.mrf.mxu0
  %v1016 = vadd.f32 %v945, %v1015
  %v1017 = vpop.f32.mrf.mxu0
  %1018 = vdwg.mxu0
  %v1020 = vsel %vm34, %v1016, 0
  %1022 = vmatprep.subr.mxu0 0.0
  %1023 = vmatpush1.msra.mxu0 0.0
  %1024 = vmatprep.subr.mxu0 0.0
  %1025 = vmatpush1.msra.mxu0 0.0
  %1026 = vmatprep.subr.mxu0 0.0
  %1027 = vmatpush1.msra.mxu0 0.0
  %1028 = vmatprep.subr.mxu0 0.0
  %1029 = vmatpush1.msra.mxu0 0.0
  %1030 = vmatprep.subr.mxu0 0.0
  %1031 = vmatpush1.msra.mxu0 0.0
  %1032 = vmatprep.subr.mxu0 0.0
  %1033 = vmatpush1.msra.mxu0 0.0
  %1034 = vmatprep.subr.mxu0 0.0
  %1035 = vmatpush1.msra.mxu0 0.0
  %1036 = vmatprep.subr.mxu0 0.0
  %1037 = vmatpush1.msra.mxu0 0.0
  %1038 = vmatprep.subr.mxu0 0.0
  %1039 = vmatpush1.msra.mxu0 0.0
  %1040 = vmatprep.subr.mxu0 0.0
  %1041 = vmatpush1.msra.mxu0 0.0
  %1042 = vmatprep.subr.mxu0 0.0
  %1043 = vmatpush1.msra.mxu0 0.0
  %1044 = vmatprep.subr.mxu0 0.0
  %1045 = vmatpush1.msra.mxu0 0.0
  %1046 = vmatprep.subr.mxu0 0.0
  %1047 = vmatpush1.msra.mxu0 %v19
  %1048 = vmatprep.subr.mxu0 0.0
  %1049 = vmatpush1.msra.mxu0 %v18
  %1050 = vmatprep.subr.mxu0 0.0
  %1051 = vmatpush1.msra.mxu0 %v17
  %1052 = vmatprep.subr.mxu0 0.0
  %1053 = vmatpush1.msra.mxu0 %v16
  %1054 = vmatprep.subr.mxu0 0.0
  %1055 = vmatpush2.msra.mxu0 0.0
  %1056 = vmatprep.subr.mxu0 0.0
  %1057 = vmatpush2.msra.mxu0 0.0
  %1058 = vmatprep.subr.mxu0 0.0
  %1059 = vmatpush2.msra.mxu0 0.0
  %1060 = vmatprep.subr.mxu0 0.0
  %1061 = vmatpush2.msra.mxu0 0.0
  %1062 = vmatprep.subr.mxu0 0.0
  %1063 = vmatpush2.msra.mxu0 0.0
  %1064 = vmatprep.subr.mxu0 0.0
  %1065 = vmatpush2.msra.mxu0 0.0
  %1066 = vmatprep.subr.mxu0 0.0
  %1067 = vmatpush2.msra.mxu0 0.0
  %1068 = vmatprep.subr.mxu0 0.0
  %1069 = vmatpush2.msra.mxu0 0.0
  %1070 = vmatprep.subr.mxu0 0.0
  %1071 = vmatpush2.msra.mxu0 0.0
  %1072 = vmatprep.subr.mxu0 0.0
  %1073 = vmatpush2.msra.mxu0 0.0
  %1074 = vmatprep.subr.mxu0 0.0
  %1075 = vmatpush2.msra.mxu0 0.0
  %1076 = vmatprep.subr.mxu0 0.0
  %1077 = vmatpush2.msra.mxu0 0.0
  %1078 = vmatprep.subr.mxu0 0.0
  %1079 = vmatpush2.msra.mxu0 0.0
  %1080 = vmatprep.subr.mxu0 0.0
  %1081 = vmatpush2.msra.mxu0 0.0
  %1082 = vmatprep.subr.mxu0 0.0
  %1083 = vmatpush2.msra.mxu0 0.0
  %1084 = vmatprep.subr.mxu0 0.0
  %1085 = vmatpush2.msra.mxu0 0.0
  %1086 = vmatprep.mubr.f32.mxu0 0.0
  %1087 = vmatmul.mubr.f32.gmra.mxu0 %v1020
  %v1088 = vpop.f32.mrf.mxu0
  %v1089 = vadd.f32 0.0, %v1088
  %v1090 = vpop.f32.mrf.mxu0
  %1091 = vdwg.mxu0
  %v1092 = vtanh.pop %v1089
  %v1093 = vadd.f32 %v1016, %v1092
  %s1094 = scalar_lea.vmem %s3, 14
  %1095 = vst.msk [vmem:[%s1094] sm:$0x3] %vm31, %v1093
  %1096 = vst.msk [vmem:[%s4] sm:$0x3] %vm31, %v1093
  %v1098 = vsel %vm34, %v1093, 0
  %1100 = vmatprep.subr.mxu0 0.0
  %1101 = vmatpush1.msra.mxu0 0.0
  %1102 = vmatprep.subr.mxu0 0.0
  %1103 = vmatpush1.msra.mxu0 0.0
  %1104 = vmatprep.subr.mxu0 0.0
  %1105 = vmatpush1.msra.mxu0 0.0
  %1106 = vmatprep.subr.mxu0 0.0
  %1107 = vmatpush1.msra.mxu0 0.0
  %1108 = vmatprep.subr.mxu0 0.0
  %1109 = vmatpush1.msra.mxu0 0.0
  %1110 = vmatprep.subr.mxu0 0.0
  %1111 = vmatpush1.msra.mxu0 0.0
  %1112 = vmatprep.subr.mxu0 0.0
  %1113 = vmatpush1.msra.mxu0 0.0
  %1114 = vmatprep.subr.mxu0 0.0
  %1115 = vmatpush1.msra.mxu0 0.0
  %1116 = vmatprep.subr.mxu0 0.0
  %1117 = vmatpush1.msra.mxu0 0.0
  %1118 = vmatprep.subr.mxu0 0.0
  %1119 = vmatpush1.msra.mxu0 0.0
  %1120 = vmatprep.subr.mxu0 0.0
  %1121 = vmatpush1.msra.mxu0 0.0
  %1122 = vmatprep.subr.mxu0 0.0
  %1123 = vmatpush1.msra.mxu0 0.0
  %1124 = vmatprep.subr.mxu0 0.0
  %1125 = vmatpush1.msra.mxu0 %v19
  %1126 = vmatprep.subr.mxu0 0.0
  %1127 = vmatpush1.msra.mxu0 %v18
  %1128 = vmatprep.subr.mxu0 0.0
  %1129 = vmatpush1.msra.mxu0 %v17
  %1130 = vmatprep.subr.mxu0 0.0
  %1131 = vmatpush1.msra.mxu0 %v16
  %1132 = vmatprep.subr.mxu0 0.0
  %1133 = vmatpush2.msra.mxu0 0.0
  %1134 = vmatprep.subr.mxu0 0.0
  %1135 = vmatpush2.msra.mxu0 0.0
  %1136 = vmatprep.subr.mxu0 0.0
  %1137 = vmatpush2.msra.mxu0 0.0
  %1138 = vmatprep.subr.mxu0 0.0
  %1139 = vmatpush2.msra.mxu0 0.0
  %1140 = vmatprep.subr.mxu0 0.0
  %1141 = vmatpush2.msra.mxu0 0.0
  %1142 = vmatprep.subr.mxu0 0.0
  %1143 = vmatpush2.msra.mxu0 0.0
  %1144 = vmatprep.subr.mxu0 0.0
  %1145 = vmatpush2.msra.mxu0 0.0
  %1146 = vmatprep.subr.mxu0 0.0
  %1147 = vmatpush2.msra.mxu0 0.0
  %1148 = vmatprep.subr.mxu0 0.0
  %1149 = vmatpush2.msra.mxu0 0.0
  %1150 = vmatprep.subr.mxu0 0.0
  %1151 = vmatpush2.msra.mxu0 0.0
  %1152 = vmatprep.subr.mxu0 0.0
  %1153 = vmatpush2.msra.mxu0 0.0
  %1154 = vmatprep.subr.mxu0 0.0
  %1155 = vmatpush2.msra.mxu0 0.0
  %1156 = vmatprep.subr.mxu0 0.0
  %1157 = vmatpush2.msra.mxu0 0.0
  %1158 = vmatprep.subr.mxu0 0.0
  %1159 = vmatpush2.msra.mxu0 0.0
  %1160 = vmatprep.subr.mxu0 0.0
  %1161 = vmatpush2.msra.mxu0 0.0
  %1162 = vmatprep.subr.mxu0 0.0
  %1163 = vmatpush2.msra.mxu0 0.0
  %1164 = vmatprep.mubr.f32.mxu0 0.0
  %1165 = vmatmul.mubr.f32.gmra.mxu0 %v1098
  %v1166 = vpop.f32.mrf.mxu0
  %v1167 = vadd.f32 0.0, %v1166
  %v1168 = vpop.f32.mrf.mxu0
  %1169 = vdwg.mxu0
  %v1170 = vtanh.pop %v1167
  %v1171 = vadd.f32 %v1093, %v1170
  %s1172 = scalar_lea.vmem %s4, 2
  %1173 = vst.msk [vmem:[%s1172] sm:$0x3] %vm31, %v1171
  %v1175 = vsel %vm34, %v1171, 0
  %1177 = vmatprep.subr.mxu0 0.0
  %1178 = vmatpush1.msra.mxu0 0.0
  %1179 = vmatprep.subr.mxu0 0.0
  %1180 = vmatpush1.msra.mxu0 0.0
  %1181 = vmatprep.subr.mxu0 0.0
  %1182 = vmatpush1.msra.mxu0 0.0
  %1183 = vmatprep.subr.mxu0 0.0
  %1184 = vmatpush1.msra.mxu0 0.0
  %1185 = vmatprep.subr.mxu0 0.0
  %1186 = vmatpush1.msra.mxu0 0.0
  %1187 = vmatprep.subr.mxu0 0.0
  %1188 = vmatpush1.msra.mxu0 0.0
  %1189 = vmatprep.subr.mxu0 0.0
  %1190 = vmatpush1.msra.mxu0 0.0
  %1191 = vmatprep.subr.mxu0 0.0
  %1192 = vmatpush1.msra.mxu0 0.0
  %1193 = vmatprep.subr.mxu0 0.0
  %1194 = vmatpush1.msra.mxu0 0.0
  %1195 = vmatprep.subr.mxu0 0.0
  %1196 = vmatpush1.msra.mxu0 0.0
  %1197 = vmatprep.subr.mxu0 0.0
  %1198 = vmatpush1.msra.mxu0 0.0
  %1199 = vmatprep.subr.mxu0 0.0
  %1200 = vmatpush1.msra.mxu0 0.0
  %1201 = vmatprep.subr.mxu0 0.0
  %1202 = vmatpush1.msra.mxu0 %v19
  %1203 = vmatprep.subr.mxu0 0.0
  %1204 = vmatpush1.msra.mxu0 %v18
  %1205 = vmatprep.subr.mxu0 0.0
  %1206 = vmatpush1.msra.mxu0 %v17
  %1207 = vmatprep.subr.mxu0 0.0
  %1208 = vmatpush1.msra.mxu0 %v16
  %1209 = vmatprep.subr.mxu0 0.0
  %1210 = vmatpush2.msra.mxu0 0.0
  %1211 = vmatprep.subr.mxu0 0.0
  %1212 = vmatpush2.msra.mxu0 0.0
  %1213 = vmatprep.subr.mxu0 0.0
  %1214 = vmatpush2.msra.mxu0 0.0
  %1215 = vmatprep.subr.mxu0 0.0
  %1216 = vmatpush2.msra.mxu0 0.0
  %1217 = vmatprep.subr.mxu0 0.0
  %1218 = vmatpush2.msra.mxu0 0.0
  %1219 = vmatprep.subr.mxu0 0.0
  %1220 = vmatpush2.msra.mxu0 0.0
  %1221 = vmatprep.subr.mxu0 0.0
  %1222 = vmatpush2.msra.mxu0 0.0
  %1223 = vmatprep.subr.mxu0 0.0
  %1224 = vmatpush2.msra.mxu0 0.0
  %1225 = vmatprep.subr.mxu0 0.0
  %1226 = vmatpush2.msra.mxu0 0.0
  %1227 = vmatprep.subr.mxu0 0.0
  %1228 = vmatpush2.msra.mxu0 0.0
  %1229 = vmatprep.subr.mxu0 0.0
  %1230 = vmatpush2.msra.mxu0 0.0
  %1231 = vmatprep.subr.mxu0 0.0
  %1232 = vmatpush2.msra.mxu0 0.0
  %1233 = vmatprep.subr.mxu0 0.0
  %1234 = vmatpush2.msra.mxu0 0.0
  %1235 = vmatprep.subr.mxu0 0.0
  %1236 = vmatpush2.msra.mxu0 0.0
  %1237 = vmatprep.subr.mxu0 0.0
  %1238 = vmatpush2.msra.mxu0 0.0
  %1239 = vmatprep.subr.mxu0 0.0
  %1240 = vmatpush2.msra.mxu0 0.0
  %1241 = vmatprep.mubr.f32.mxu0 0.0
  %1242 = vmatmul.mubr.f32.gmra.mxu0 %v1175
  %v1243 = vpop.f32.mrf.mxu0
  %v1244 = vadd.f32 0.0, %v1243
  %v1245 = vpop.f32.mrf.mxu0
  %1246 = vdwg.mxu0
  %v1247 = vtanh.pop %v1244
  %v1248 = vadd.f32 %v1171, %v1247
  %s1249 = scalar_lea.vmem %s4, 4
  %1250 = vst.msk [vmem:[%s1249] sm:$0x3] %vm31, %v1248
  %v1252 = vsel %vm34, %v1248, 0
  %1254 = vmatprep.subr.mxu0 0.0
  %1255 = vmatpush1.msra.mxu0 0.0
  %1256 = vmatprep.subr.mxu0 0.0
  %1257 = vmatpush1.msra.mxu0 0.0
  %1258 = vmatprep.subr.mxu0 0.0
  %1259 = vmatpush1.msra.mxu0 0.0
  %1260 = vmatprep.subr.mxu0 0.0
  %1261 = vmatpush1.msra.mxu0 0.0
  %1262 = vmatprep.subr.mxu0 0.0
  %1263 = vmatpush1.msra.mxu0 0.0
  %1264 = vmatprep.subr.mxu0 0.0
  %1265 = vmatpush1.msra.mxu0 0.0
  %1266 = vmatprep.subr.mxu0 0.0
  %1267 = vmatpush1.msra.mxu0 0.0
  %1268 = vmatprep.subr.mxu0 0.0
  %1269 = vmatpush1.msra.mxu0 0.0
  %1270 = vmatprep.subr.mxu0 0.0
  %1271 = vmatpush1.msra.mxu0 0.0
  %1272 = vmatprep.subr.mxu0 0.0
  %1273 = vmatpush1.msra.mxu0 0.0
  %1274 = vmatprep.subr.mxu0 0.0
  %1275 = vmatpush1.msra.mxu0 0.0
  %1276 = vmatprep.subr.mxu0 0.0
  %1277 = vmatpush1.msra.mxu0 0.0
  %1278 = vmatprep.subr.mxu0 0.0
  %1279 = vmatpush1.msra.mxu0 %v19
  %1280 = vmatprep.subr.mxu0 0.0
  %1281 = vmatpush1.msra.mxu0 %v18
  %1282 = vmatprep.subr.mxu0 0.0
  %1283 = vmatpush1.msra.mxu0 %v17
  %1284 = vmatprep.subr.mxu0 0.0
  %1285 = vmatpush1.msra.mxu0 %v16
  %1286 = vmatprep.subr.mxu0 0.0
  %1287 = vmatpush2.msra.mxu0 0.0
  %1288 = vmatprep.subr.mxu0 0.0
  %1289 = vmatpush2.msra.mxu0 0.0
  %1290 = vmatprep.subr.mxu0 0.0
  %1291 = vmatpush2.msra.mxu0 0.0
  %1292 = vmatprep.subr.mxu0 0.0
  %1293 = vmatpush2.msra.mxu0 0.0
  %1294 = vmatprep.subr.mxu0 0.0
  %1295 = vmatpush2.msra.mxu0 0.0
  %1296 = vmatprep.subr.mxu0 0.0
  %1297 = vmatpush2.msra.mxu0 0.0
  %1298 = vmatprep.subr.mxu0 0.0
  %1299 = vmatpush2.msra.mxu0 0.0
  %1300 = vmatprep.subr.mxu0 0.0
  %1301 = vmatpush2.msra.mxu0 0.0
  %1302 = vmatprep.subr.mxu0 0.0
  %1303 = vmatpush2.msra.mxu0 0.0
  %1304 = vmatprep.subr.mxu0 0.0
  %1305 = vmatpush2.msra.mxu0 0.0
  %1306 = vmatprep.subr.mxu0 0.0
  %1307 = vmatpush2.msra.mxu0 0.0
  %1308 = vmatprep.subr.mxu0 0.0
  %1309 = vmatpush2.msra.mxu0 0.0
  %1310 = vmatprep.subr.mxu0 0.0
  %1311 = vmatpush2.msra.mxu0 0.0
  %1312 = vmatprep.subr.mxu0 0.0
  %1313 = vmatpush2.msra.mxu0 0.0
  %1314 = vmatprep.subr.mxu0 0.0
  %1315 = vmatpush2.msra.mxu0 0.0
  %1316 = vmatprep.subr.mxu0 0.0
  %1317 = vmatpush2.msra.mxu0 0.0
  %1318 = vmatprep.mubr.f32.mxu0 0.0
  %1319 = vmatmul.mubr.f32.gmra.mxu0 %v1252
  %v1320 = vpop.f32.mrf.mxu0
  %v1321 = vadd.f32 0.0, %v1320
  %v1322 = vpop.f32.mrf.mxu0
  %1323 = vdwg.mxu0
  %v1324 = vtanh.pop %v1321
  %v1325 = vadd.f32 %v1248, %v1324
  %s1326 = scalar_lea.vmem %s4, 6
  %1327 = vst.msk [vmem:[%s1326] sm:$0x3] %vm31, %v1325
  // Predicated region
  $region14: #{_lform_forward_impl.1} parent=0 // pred_check
    _
  $region15: #{_lform_forward_impl.1} parent=0 // pred_check_branch
    %1329 = sbr.rel (0) target = $region17
  $region16: #{_lform_forward_impl.1} parent=0 // pred_region
    _
  $region17: #{_lform_forward_impl.1} parent=0 // pred_fallthru
    _
  // Predicated region
  $region18: #{_lform_forward_impl.1} parent=0 // pred_check
    _
  $region19: #{_lform_forward_impl.1} parent=0 // pred_check_branch
    %1331 = sbr.rel (0) target = $region21
  $region20: #{_lform_forward_impl.1} parent=0 // pred_region
    _
  $region21: #{_lform_forward_impl.1} parent=0 // pred_fallthru
    _
  // Predicated region
  $region22: #{_lform_forward_impl.1} parent=0 // pred_check
    _
  $region23: #{_lform_forward_impl.1} parent=0 // pred_check_branch
    %1333 = sbr.rel (0) target = $region25
  $region24: #{_lform_forward_impl.1} parent=0 // pred_region
    _
  $region25: #{_lform_forward_impl.1} parent=0 // pred_fallthru
    _
  // Predicated region
  $region26: #{_lform_forward_impl.1} parent=0 // pred_check
    _
  $region27: #{_lform_forward_impl.1} parent=0 // pred_check_branch
    %1335 = sbr.rel (0) target = $region29
  $region28: #{_lform_forward_impl.1} parent=0 // pred_region
    _
  $region29: #{_lform_forward_impl.1} parent=0 // pred_fallthru
    _

</llo_original>
